<compile_context>
chip_gen: v6e
topology: v6e:2x2x1
jax: 0.10.0
libtpu: 0.0.40
codegen_flags: <defaults>
</compile_context>

<pallas_src>
import functools

import jax
import jax.numpy as jnp
from jax import lax
from jax.experimental import pallas as pl
from jax.experimental.pallas import tpu as pltpu


def _decoder_kernel(h_ref, gold_ref, mask_ref, w_ref,
                    loss_ref, acc_ref, seq_ref, *, matmul_dtype):
    """One (batch-tile, T-chunk) grid step.

    h_ref    : (Tc, Bb, H)  per-step hidden states (native dtype, cast in-kernel)
    gold_ref : (Tc, Bb, 1)  gold action ids, 0 = ignore/terminated
    mask_ref : (Tc, Bb, 1)  termination mask (1 = still decoding)
    w_ref    : (H, V)       action projection (grid-invariant)
    loss/acc/seq_ref : (1, Bb, 1) per-example accumulators, resident across the
                       T-chunk ("arbitrary") grid axis.
    """
    t_idx = pl.program_id(1)

    @pl.when(t_idx == 0)
    def _():
        loss_ref[...] = jnp.zeros_like(loss_ref)
        acc_ref[...] = jnp.zeros_like(acc_ref)
        seq_ref[...] = jnp.ones_like(seq_ref)

    Tc, Bb, H = h_ref.shape
    V = w_ref.shape[1]

    # TransitionModel hot path: one MXU contraction for all Tc steps of this
    # tile.  Operands are cast to matmul_dtype (bf16 by default) *inside* the
    # kernel so h/w DMA at their native dtype (no extra wrapper HBM pass) and
    # the reshape stays on the f32 (8,128) layout.  f32 MXU accumulation.
    # TODO(synk): at realistic shapes pad H / V to MXU tile multiples (256 on
    # v6e/v7x, 128 on v5e) and mask padded vocab columns to -inf.
    h2 = h_ref[...].reshape(Tc * Bb, H).astype(matmul_dtype)
    logits = jnp.dot(h2, w_ref[...].astype(matmul_dtype),
                     preferred_element_type=jnp.float32)
    logits = logits.reshape(Tc, Bb, V)                          # f32

    g = gold_ref[...]                                           # (Tc, Bb, 1) i32
    m = mask_ref[...]                                           # (Tc, Bb, 1) f32

    # CE loss (mode='probs', ignore_index=0) in log-softmax form: no probs
    # materialized, no divide, no clamp; exp/log run on the EUP slot, f32 math.
    row_max = jnp.max(logits, axis=-1, keepdims=True)           # (Tc, Bb, 1)
    sum_exp = jnp.sum(jnp.exp(logits - row_max), axis=-1, keepdims=True)
    lse = row_max + jnp.log(sum_exp)                            # (Tc, Bb, 1)

    # Gold logit via one-hot select against a single small (1, 1, V) iota.
    iota_v = lax.broadcasted_iota(jnp.int32, (1, 1, V), 2)
    gold_logit = jnp.sum(jnp.where(iota_v == g, logits, 0.0),
                         axis=-1, keepdims=True)                # (Tc, Bb, 1)

    valid = (g != 0).astype(jnp.float32)                        # ignore_index == 0
    step_loss = (lse - gold_logit) * valid                      # (Tc, Bb, 1)

    # Accuracy: "the gold logit attains the row max".  Identical to
    # (argmax == gold) except on exact float ties (argmax tie-breaks to the
    # first maximum); saves a (Tc,Bb,V) compare/select and an XLU min-reduce.
    step_acc = (gold_logit >= row_max).astype(jnp.float32)      # (Tc, Bb, 1)

    # Per-example reductions over this T-chunk, accumulated across chunks.
    loss_ref[...] += jnp.sum(step_loss * m, axis=0, keepdims=True)
    acc_ref[...] += jnp.sum(step_acc, axis=0, keepdims=True)
    step_ok = jnp.where((step_acc > 0.0) | (m <= 0.0), 1.0, 0.0)
    seq_ref[...] = jnp.minimum(seq_ref[...],
                               jnp.min(step_ok, axis=0, keepdims=True))


def _step_vmem_bytes(t_chunk, b_tile, H, V, h_bytes):
    """Rough per-grid-step VMEM working set (for tile sizing / vmem limit)."""
    return (2 * t_chunk * b_tile * H * h_bytes        # h tile, double-buffered
            + 2 * t_chunk * b_tile * (4 + 4)          # gold(i32)+mask(f32), 2-buf
            + H * V * 4                               # w, single-buffered
            + 4 * t_chunk * b_tile * V * 4            # f32 logits + epilogue temps
            + 6 * b_tile * 4)                         # (1, Bb, 1) accumulators


def _choose_tiles(T, B, H, V, h_bytes, budget_bytes):
    # Batch tile: multiple of 8 (f32 sublanes), <= 128, and small enough that
    # the "parallel" batch axis has >= 2 grid steps whenever B allows it so
    # v7x's two TensorCores both get work (and huge B never lands in one tile).
    b_tile = 8
    for cand in (128, 64, 32, 16, 8):
        if B >= 2 * cand or (cand == 8 and B >= cand):
            b_tile = cand
            break
    while b_tile > 8 and _step_vmem_bytes(1, b_tile, H, V, h_bytes) > budget_bytes:
        b_tile //= 2
    # Largest divisor of T whose working set fits the budget; the epilogue
    # temporaries scale with t_chunk*b_tile*V and are what overflow v7x first.
    t_chunk = 1
    for tc in range(T, 0, -1):
        if T % tc == 0 and _step_vmem_bytes(tc, b_tile, H, V, h_bytes) <= budget_bytes:
            t_chunk = tc
            break
    # TODO(synk): if even t_chunk=1 overflows the budget (very large V), add a
    # V-tile grid axis with online logsumexp/accuracy accumulators.
    return b_tile, t_chunk


def tf_action_seq_decoder(h, gold, mask, w, *, matmul_dtype=jnp.bfloat16,
                          vmem_budget_bytes=24 * 1024 * 1024,
                          b_tile=None, t_chunk=None):
    """h: (T,B,H), gold: (T,B) int32 (0 = ignore), mask: (T,B), w: (H,V).

    matmul_dtype=jnp.float32 gives exact parity with the f32 PyTorch module;
    the bf16 default uses the fast MXU path with f32 accumulation.
    """
    T, B, H = h.shape
    V = w.shape[1]
    gold = gold.astype(jnp.int32)
    mask = mask.astype(jnp.float32)
    mask_total = jnp.sum(mask)                      # any_acc denominator (unpadded)

    h_bytes = jnp.dtype(h.dtype).itemsize
    auto_b, auto_t = _choose_tiles(T, B, H, V, h_bytes, vmem_budget_bytes)
    b_tile = auto_b if b_tile is None else b_tile
    t_chunk = auto_t if t_chunk is None else t_chunk
    assert b_tile % 8 == 0 and b_tile > 0, b_tile
    assert T % t_chunk == 0, (T, t_chunk)

    n_b = pl.cdiv(B, b_tile)
    n_t = T // t_chunk
    B_pad = n_b * b_tile
    if B_pad != B:
        # Pad the batch to a whole number of tiles; padded columns get gold=0
        # (ignored), mask=0, h=0 and are sliced off before the final reductions.
        pb = B_pad - B
        h = jnp.pad(h, ((0, 0), (0, pb), (0, 0)))
        gold = jnp.pad(gold, ((0, 0), (0, pb)))
        mask = jnp.pad(mask, ((0, 0), (0, pb)))

    # Trailing singleton keeps every block's last dim equal to the full array
    # dim, so sub-128 batch tiles satisfy the (8,128) BlockSpec constraint and
    # gold/mask arrive already in the reduced-over-V layout.
    gold3 = gold.reshape(T, B_pad, 1)
    mask3 = mask.reshape(T, B_pad, 1)

    kernel = functools.partial(_decoder_kernel, matmul_dtype=matmul_dtype)
    out_shapes = tuple(jax.ShapeDtypeStruct((1, B_pad, 1), jnp.float32)
                       for _ in range(3))
    vmem_limit = int(min(100 << 20,
                         max(32 << 20,
                             2 * _step_vmem_bytes(t_chunk, b_tile, H, V, h_bytes))))

    def make_call(single_buffer_w):
        if single_buffer_w:
            # w is grid-invariant: one VMEM buffer is enough (matters at
            # realistic H*V against v7x's 64 MiB VMEM).
            w_spec = pl.BlockSpec((H, V), lambda b, t: (0, 0),
                                  pipeline_mode=pl.Buffered(1))
        else:
            w_spec = pl.BlockSpec((H, V), lambda b, t: (0, 0))
        out_spec = pl.BlockSpec((1, b_tile, 1), lambda b, t: (0, b, 0))
        grid_spec = pltpu.PrefetchScalarGridSpec(
            num_scalar_prefetch=0,
            grid=(n_b, n_t),                        # reduction (T-chunk) axis last
            in_specs=[
                pl.BlockSpec((t_chunk, b_tile, H), lambda b, t: (t, b, 0)),
                pl.BlockSpec((t_chunk, b_tile, 1), lambda b, t: (t, b, 0)),
                pl.BlockSpec((t_chunk, b_tile, 1), lambda b, t: (t, b, 0)),
                w_spec,
            ],
            out_specs=[out_spec, out_spec, out_spec],
        )
        return pl.pallas_call(
            kernel,
            out_shape=out_shapes,
            grid_spec=grid_spec,
            compiler_params=pltpu.CompilerParams(
                dimension_semantics=("parallel", "arbitrary"),
                vmem_limit_bytes=vmem_limit),
        )

    try:
        loss_sum, acc_sum, seq_ok = make_call(True)(h, gold3, mask3, w)
    except Exception:
        # Fallback for builds whose pallas_call pipeline rejects pipeline_mode;
        # only costs one extra (H, V) VMEM buffer.
        loss_sum, acc_sum, seq_ok = make_call(False)(h, gold3, mask3, w)

    loss_sum = loss_sum[0, :B, 0]
    acc_sum = acc_sum[0, :B, 0]
    seq_ok = seq_ok[0, :B, 0]

    # Final scalar reductions (glue, matches the PyTorch tail exactly).
    loss = jnp.mean(loss_sum)                       # losses.sum(-1).mean()
    any_acc = jnp.sum(acc_sum) / mask_total         # step_accs.sum() / mask.sum()
    seq_acc = jnp.mean(seq_ok)                      # (acc | ~mask).all(-1).mean()
    return {"loss": loss, "any_acc": any_acc, "seq_acc": seq_acc}


def _reference(h, gold, mask, w, matmul_dtype=jnp.bfloat16):
    logits = jnp.einsum("tbh,hv->tbv", h.astype(matmul_dtype),
                        w.astype(matmul_dtype),
                        preferred_element_type=jnp.float32)
    lse = jax.scipy.special.logsumexp(logits, axis=-1)
    gold_logit = jnp.take_along_axis(logits, gold[..., None], axis=-1)[..., 0]
    step_loss = (lse - gold_logit) * (gold != 0).astype(jnp.float32)
    loss = jnp.mean(jnp.sum(step_loss * mask, axis=0))
    pred = jnp.argmax(logits, axis=-1)
    acc = (pred == gold).astype(jnp.float32)
    any_acc = jnp.sum(acc) / jnp.sum(mask)
    seq_acc = jnp.mean(jnp.all((acc > 0) | (mask == 0), axis=0).astype(jnp.float32))
    return {"loss": loss, "any_acc": any_acc, "seq_acc": seq_acc}


if __name__ == "__main__":
    # decoding steps, examples, hidden size, action-vocab size (small shapes)
    T, B, H, V = 8, 12, 32, 128

    key = jax.random.PRNGKey(0)
    k_h, k_w, k_g, k_len = jax.random.split(key, 4)

    # Deterministic synthetic TransitionModel state: per-step hidden states and
    # a projection matrix to the action vocabulary.
    h = jax.random.normal(k_h, (T, B, H), dtype=jnp.float32)
    w = jax.random.normal(k_w, (H, V), dtype=jnp.float32) * 0.1

    # Per-example decode lengths -> termination masks; terminated steps keep
    # gold_rule = 0 (the ignore_index), exactly like the PyTorch loop.
    lengths = jax.random.randint(k_len, (B,), minval=3, maxval=T + 1)
    steps = jnp.arange(T)[:, None]                                   # (T, 1)
    mask = (steps < lengths[None, :]).astype(jnp.float32)            # (T, B)
    gold_raw = jax.random.randint(k_g, (T, B), minval=1, maxval=V)
    gold = jnp.where(mask > 0, gold_raw, 0).astype(jnp.int32)        # (T, B)

    ref = _reference(h, gold, mask, w)

    # Default tiling (b_tile=8 -> 2 batch tiles, batch padded 12->16) plus a
    # forced multi-chunk config exercising the T-chunk accumulation path.
    for kwargs in ({}, {"b_tile": 8, "t_chunk": 2}):
        out = tf_action_seq_decoder(h, gold, mask, w, **kwargs)
        out = jax.tree_util.tree_map(jax.block_until_ready, out)
        for name in ("loss", "any_acc", "seq_acc"):
            assert jnp.allclose(out[name], ref[name], rtol=1e-4, atol=1e-4), (
                name, kwargs, out[name], ref[name])

    print("KERNEL_OK")
</pallas_src>

<mosaic_0001>
module attributes {stable_mosaic.version = 11 : i64} {
  func.func @_decoder_kernel(%arg0: i32, %arg1: i32, %arg2: memref<8x8x32xf32, #tpu.memory_space<vmem>>, %arg3: memref<8x8x1xi32, #tpu.memory_space<vmem>>, %arg4: memref<8x8x1xf32, #tpu.memory_space<vmem>>, %arg5: memref<32x128xf32, #tpu.memory_space<vmem>>, %arg6: memref<1x8x1xf32, #tpu.memory_space<vmem>>, %arg7: memref<1x8x1xf32, #tpu.memory_space<vmem>>, %arg8: memref<1x8x1xf32, #tpu.memory_space<vmem>>) attributes {dimension_semantics = [#tpu.dimension_semantics<parallel>, #tpu.dimension_semantics<arbitrary>], iteration_bounds = array<i64: 2, 1>, scalar_prefetch = 0 : i64, scratch_operands = 0 : i64, tpu.core_type = #tpu.core_type<tc>, window_params = [{transform_indices = @transform_0, window_bounds = array<i64: 8, 8, 32>}, {transform_indices = @transform_1, window_bounds = array<i64: 8, 8, 1>}, {transform_indices = @transform_2, window_bounds = array<i64: 8, 8, 1>}, {pipeline_mode = #tpu.pipeline_mode<synchronous>, transform_indices = @transform_3, window_bounds = array<i64: 32, 128>}, {transform_indices = @transform_4, window_bounds = array<i64: 1, 8, 1>}, {transform_indices = @transform_5, window_bounds = array<i64: 1, 8, 1>}, {transform_indices = @transform_6, window_bounds = array<i64: 1, 8, 1>}]} {
    %c0_i32 = arith.constant 0 : i32
    %0 = arith.cmpi eq, %arg1, %c0_i32 : i32
    %1 = arith.extui %0 : i1 to i32
    %c0_i32_0 = arith.constant 0 : i32
    %2 = arith.cmpi ne, %1, %c0_i32_0 : i32
    scf.if %2 {
      %cst_41 = arith.constant 0.000000e+00 : f32
      %62 = vector.broadcast %cst_41 : f32 to vector<1x8x1xf32>
      %c0_42 = arith.constant 0 : index
      %c0_43 = arith.constant 0 : index
      %c0_44 = arith.constant 0 : index
      %63 = vector.load %arg6[%c0_42, %c0_43, %c0_44] : memref<1x8x1xf32, #tpu.memory_space<vmem>>, vector<1x8x1xf32>
      tpu.vector_store %arg6[%c0_42, %c0_43, %c0_44], %62 {strides = array<i32>} : memref<1x8x1xf32, #tpu.memory_space<vmem>>, vector<1x8x1xf32>,
      %cst_45 = arith.constant 0.000000e+00 : f32
      %64 = vector.broadcast %cst_45 : f32 to vector<1x8x1xf32>
      %c0_46 = arith.constant 0 : index
      %c0_47 = arith.constant 0 : index
      %c0_48 = arith.constant 0 : index
      %65 = vector.load %arg7[%c0_46, %c0_47, %c0_48] : memref<1x8x1xf32, #tpu.memory_space<vmem>>, vector<1x8x1xf32>
      tpu.vector_store %arg7[%c0_46, %c0_47, %c0_48], %64 {strides = array<i32>} : memref<1x8x1xf32, #tpu.memory_space<vmem>>, vector<1x8x1xf32>,
      %cst_49 = arith.constant 1.000000e+00 : f32
      %66 = vector.broadcast %cst_49 : f32 to vector<1x8x1xf32>
      %c0_50 = arith.constant 0 : index
      %c0_51 = arith.constant 0 : index
      %c0_52 = arith.constant 0 : index
      %67 = vector.load %arg8[%c0_50, %c0_51, %c0_52] : memref<1x8x1xf32, #tpu.memory_space<vmem>>, vector<1x8x1xf32>
      tpu.vector_store %arg8[%c0_50, %c0_51, %c0_52], %66 {strides = array<i32>} : memref<1x8x1xf32, #tpu.memory_space<vmem>>, vector<1x8x1xf32>,
    } else {
    }
    %c0 = arith.constant 0 : index
    %c0_1 = arith.constant 0 : index
    %c0_2 = arith.constant 0 : index
    %3 = vector.load %arg2[%c0, %c0_1, %c0_2] : memref<8x8x32xf32, #tpu.memory_space<vmem>>, vector<8x8x32xf32>
    %4 = vector.shape_cast %3 : vector<8x8x32xf32> to vector<64x32xf32>
    %5 = arith.truncf %4 : vector<64x32xf32> to vector<64x32xbf16>
    %c0_3 = arith.constant 0 : index
    %c0_4 = arith.constant 0 : index
    %6 = vector.load %arg5[%c0_3, %c0_4] : memref<32x128xf32, #tpu.memory_space<vmem>>, vector<32x128xf32>
    %7 = arith.truncf %6 : vector<32x128xf32> to vector<32x128xbf16>
    %cst = arith.constant dense<0.000000e+00> : vector<64x128xf32>
    %8 = tpu.matmul %5, %7, %cst {dimension_numbers = #tpu.dot_dimension_numbers<[1], [0], [0], [1], [0, 0, 1, 1], [], []>} : vector<64x32xbf16>, vector<32x128xbf16>, vector<64x128xf32> -> vector<64x128xf32>
    %9 = vector.shape_cast %8 : vector<64x128xf32> to vector<8x8x128xf32>
    %c0_5 = arith.constant 0 : index
    %c0_6 = arith.constant 0 : index
    %c0_7 = arith.constant 0 : index
    %10 = vector.load %arg3[%c0_5, %c0_6, %c0_7] : memref<8x8x1xi32, #tpu.memory_space<vmem>>, vector<8x8x1xi32>
    %c0_8 = arith.constant 0 : index
    %c0_9 = arith.constant 0 : index
    %c0_10 = arith.constant 0 : index
    %11 = vector.load %arg4[%c0_8, %c0_9, %c0_10] : memref<8x8x1xf32, #tpu.memory_space<vmem>>, vector<8x8x1xf32>
    %cst_11 = arith.constant dense<0xFF800000> : vector<8x8xf32>
    %12 = vector.multi_reduction <maximumf>, %9, %cst_11 [2] : vector<8x8x128xf32> to vector<8x8xf32>
    %13 = vector.shape_cast %12 : vector<8x8xf32> to vector<8x8x1xf32>
    %14 = vector.broadcast %13 : vector<8x8x1xf32> to vector<8x8x128xf32>
    %15 = arith.subf %9, %14 : vector<8x8x128xf32>
    %16 = math.exp %15 : vector<8x8x128xf32>
    %cst_12 = arith.constant dense<0.000000e+00> : vector<8x8xf32>
    %17 = vector.multi_reduction <add>, %16, %cst_12 [2] : vector<8x8x128xf32> to vector<8x8xf32>
    %18 = vector.shape_cast %17 : vector<8x8xf32> to vector<8x8x1xf32>
    %19 = math.log %18 : vector<8x8x1xf32>
    %20 = arith.addf %13, %19 : vector<8x8x1xf32>
    %21 = tpu.iota {dimensions = array<i32: 2>} : vector<1x1x128xi32>
    %22 = vector.broadcast %21 : vector<1x1x128xi32> to vector<8x8x128xi32>
    %23 = vector.broadcast %10 : vector<8x8x1xi32> to vector<8x8x128xi32>
    %24 = arith.cmpi eq, %22, %23 : vector<8x8x128xi32>
    %cst_13 = arith.constant 0.000000e+00 : f32
    %25 = vector.broadcast %cst_13 : f32 to vector<8x8x128xf32>
    %26 = arith.select %24, %9, %25 : vector<8x8x128xi1>, vector<8x8x128xf32>
    %cst_14 = arith.constant dense<0.000000e+00> : vector<8x8xf32>
    %27 = vector.multi_reduction <add>, %26, %cst_14 [2] : vector<8x8x128xf32> to vector<8x8xf32>
    %28 = vector.shape_cast %27 : vector<8x8xf32> to vector<8x8x1xf32>
    %c0_i32_15 = arith.constant 0 : i32
    %29 = vector.broadcast %c0_i32_15 : i32 to vector<8x8x1xi32>
    %30 = arith.cmpi ne, %10, %29 : vector<8x8x1xi32>
    %31 = arith.extui %30 : vector<8x8x1xi1> to vector<8x8x1xi32>
    %32 = arith.sitofp %31 : vector<8x8x1xi32> to vector<8x8x1xf32>
    %33 = arith.subf %20, %28 : vector<8x8x1xf32>
    %34 = arith.mulf %33, %32 : vector<8x8x1xf32>
    %35 = arith.cmpf oge, %28, %13 : vector<8x8x1xf32>
    %36 = arith.extui %35 : vector<8x8x1xi1> to vector<8x8x1xi32>
    %37 = arith.sitofp %36 : vector<8x8x1xi32> to vector<8x8x1xf32>
    %c0_16 = arith.constant 0 : index
    %c0_17 = arith.constant 0 : index
    %c0_18 = arith.constant 0 : index
    %38 = vector.load %arg6[%c0_16, %c0_17, %c0_18] : memref<1x8x1xf32, #tpu.memory_space<vmem>>, vector<1x8x1xf32>
    %39 = arith.mulf %34, %11 : vector<8x8x1xf32>
    %cst_19 = arith.constant dense<0.000000e+00> : vector<8x1xf32>
    %40 = vector.multi_reduction <add>, %39, %cst_19 [0] : vector<8x8x1xf32> to vector<8x1xf32>
    %41 = vector.shape_cast %40 : vector<8x1xf32> to vector<1x8x1xf32>
    %42 = arith.addf %38, %41 : vector<1x8x1xf32>
    %c0_20 = arith.constant 0 : index
    %c0_21 = arith.constant 0 : index
    %c0_22 = arith.constant 0 : index
    %43 = vector.load %arg6[%c0_20, %c0_21, %c0_22] : memref<1x8x1xf32, #tpu.memory_space<vmem>>, vector<1x8x1xf32>
    tpu.vector_store %arg6[%c0_20, %c0_21, %c0_22], %42 {strides = array<i32>} : memref<1x8x1xf32, #tpu.memory_space<vmem>>, vector<1x8x1xf32>,
    %c0_23 = arith.constant 0 : index
    %c0_24 = arith.constant 0 : index
    %c0_25 = arith.constant 0 : index
    %44 = vector.load %arg7[%c0_23, %c0_24, %c0_25] : memref<1x8x1xf32, #tpu.memory_space<vmem>>, vector<1x8x1xf32>
    %cst_26 = arith.constant dense<0.000000e+00> : vector<8x1xf32>
    %45 = vector.multi_reduction <add>, %37, %cst_26 [0] : vector<8x8x1xf32> to vector<8x1xf32>
    %46 = vector.shape_cast %45 : vector<8x1xf32> to vector<1x8x1xf32>
    %47 = arith.addf %44, %46 : vector<1x8x1xf32>
    %c0_27 = arith.constant 0 : index
    %c0_28 = arith.constant 0 : index
    %c0_29 = arith.constant 0 : index
    %48 = vector.load %arg7[%c0_27, %c0_28, %c0_29] : memref<1x8x1xf32, #tpu.memory_space<vmem>>, vector<1x8x1xf32>
    tpu.vector_store %arg7[%c0_27, %c0_28, %c0_29], %47 {strides = array<i32>} : memref<1x8x1xf32, #tpu.memory_space<vmem>>, vector<1x8x1xf32>,
    %cst_30 = arith.constant 0.000000e+00 : f32
    %49 = vector.broadcast %cst_30 : f32 to vector<8x8x1xf32>
    %50 = arith.cmpf ogt, %37, %49 : vector<8x8x1xf32>
    %cst_31 = arith.constant 0.000000e+00 : f32
    %51 = vector.broadcast %cst_31 : f32 to vector<8x8x1xf32>
    %52 = arith.cmpf ole, %11, %51 : vector<8x8x1xf32>
    %53 = arith.ori %50, %52 : vector<8x8x1xi1>
    %cst_32 = arith.constant 1.000000e+00 : f32
    %cst_33 = arith.constant 0.000000e+00 : f32
    %54 = vector.broadcast %cst_32 : f32 to vector<8x8x1xf32>
    %55 = vector.broadcast %cst_33 : f32 to vector<8x8x1xf32>
    %56 = arith.select %53, %54, %55 : vector<8x8x1xi1>, vector<8x8x1xf32>
    %c0_34 = arith.constant 0 : index
    %c0_35 = arith.constant 0 : index
    %c0_36 = arith.constant 0 : index
    %57 = vector.load %arg8[%c0_34, %c0_35, %c0_36] : memref<1x8x1xf32, #tpu.memory_space<vmem>>, vector<1x8x1xf32>
    %cst_37 = arith.constant dense<0x7F800000> : vector<8x1xf32>
    %58 = vector.multi_reduction <minimumf>, %56, %cst_37 [0] : vector<8x8x1xf32> to vector<8x1xf32>
    %59 = vector.shape_cast %58 : vector<8x1xf32> to vector<1x8x1xf32>
    %60 = arith.minimumf %57, %59 : vector<1x8x1xf32>
    %c0_38 = arith.constant 0 : index
    %c0_39 = arith.constant 0 : index
    %c0_40 = arith.constant 0 : index
    %61 = vector.load %arg8[%c0_38, %c0_39, %c0_40] : memref<1x8x1xf32, #tpu.memory_space<vmem>>, vector<1x8x1xf32>
    tpu.vector_store %arg8[%c0_38, %c0_39, %c0_40], %60 {strides = array<i32>} : memref<1x8x1xf32, #tpu.memory_space<vmem>>, vector<1x8x1xf32>,
    return
  }
  func.func @transform_0(%arg0: i32, %arg1: i32) -> (i32, i32, i32) {
    %c0_i32 = arith.constant 0 : i32
    %c0_i32_0 = arith.constant 0 : i32
    return %arg1, %arg0, %c0_i32 : i32, i32, i32
  }
  func.func @transform_1(%arg0: i32, %arg1: i32) -> (i32, i32, i32) {
    %c0_i32 = arith.constant 0 : i32
    %c0_i32_0 = arith.constant 0 : i32
    return %arg1, %arg0, %c0_i32 : i32, i32, i32
  }
  func.func @transform_2(%arg0: i32, %arg1: i32) -> (i32, i32, i32) {
    %c0_i32 = arith.constant 0 : i32
    %c0_i32_0 = arith.constant 0 : i32
    return %arg1, %arg0, %c0_i32 : i32, i32, i32
  }
  func.func @transform_3(%arg0: i32, %arg1: i32) -> (i32, i32) {
    %c0_i32 = arith.constant 0 : i32
    %c0_i32_0 = arith.constant 0 : i32
    %c0_i32_1 = arith.constant 0 : i32
    return %c0_i32, %c0_i32_0 : i32, i32
  }
  func.func @transform_4(%arg0: i32, %arg1: i32) -> (i32, i32, i32) {
    %c0_i32 = arith.constant 0 : i32
    %c0_i32_0 = arith.constant 0 : i32
    %c0_i32_1 = arith.constant 0 : i32
    return %c0_i32, %arg0, %c0_i32_0 : i32, i32, i32
  }
  func.func @transform_5(%arg0: i32, %arg1: i32) -> (i32, i32, i32) {
    %c0_i32 = arith.constant 0 : i32
    %c0_i32_0 = arith.constant 0 : i32
    %c0_i32_1 = arith.constant 0 : i32
    return %c0_i32, %arg0, %c0_i32_0 : i32, i32, i32
  }
  func.func @transform_6(%arg0: i32, %arg1: i32) -> (i32, i32, i32) {
    %c0_i32 = arith.constant 0 : i32
    %c0_i32_0 = arith.constant 0 : i32
    %c0_i32_1 = arith.constant 0 : i32
    return %c0_i32, %arg0, %c0_i32_0 : i32, i32, i32
  }
}

module attributes {stable_mosaic.version = 11 : i64} {
  func.func @_decoder_kernel(%arg0: i32, %arg1: i32, %arg2: memref<8x8x32xf32, #tpu.memory_space<vmem>>, %arg3: memref<8x8x1xi32, #tpu.memory_space<vmem>>, %arg4: memref<8x8x1xf32, #tpu.memory_space<vmem>>, %arg5: memref<32x128xf32, #tpu.memory_space<vmem>>, %arg6: memref<1x8x1xf32, #tpu.memory_space<vmem>>, %arg7: memref<1x8x1xf32, #tpu.memory_space<vmem>>, %arg8: memref<1x8x1xf32, #tpu.memory_space<vmem>>) attributes {dimension_semantics = [#tpu.dimension_semantics<parallel>, #tpu.dimension_semantics<arbitrary>], iteration_bounds = array<i64: 2, 1>, scalar_prefetch = 0 : i64, scratch_operands = 0 : i64, tpu.core_type = #tpu.core_type<tc>, window_params = [{transform_indices = @transform_0, window_bounds = array<i64: 8, 8, 32>}, {transform_indices = @transform_1, window_bounds = array<i64: 8, 8, 1>}, {transform_indices = @transform_2, window_bounds = array<i64: 8, 8, 1>}, {pipeline_mode = #tpu.pipeline_mode<synchronous>, transform_indices = @transform_3, window_bounds = array<i64: 32, 128>}, {transform_indices = @transform_4, window_bounds = array<i64: 1, 8, 1>}, {transform_indices = @transform_5, window_bounds = array<i64: 1, 8, 1>}, {transform_indices = @transform_6, window_bounds = array<i64: 1, 8, 1>}]} {
    %c0_i32 = arith.constant 0 : i32
    %0 = arith.cmpi eq, %arg1, %c0_i32 : i32
    %1 = arith.extui %0 : i1 to i32
    %c0_i32_0 = arith.constant 0 : i32
    %2 = arith.cmpi ne, %1, %c0_i32_0 : i32
    scf.if %2 {
      %cst_41 = arith.constant 0.000000e+00 : f32
      %62 = vector.broadcast %cst_41 : f32 to vector<1x8x1xf32>
      %c0_42 = arith.constant 0 : index
      %c0_43 = arith.constant 0 : index
      %c0_44 = arith.constant 0 : index
      %63 = vector.load %arg6[%c0_42, %c0_43, %c0_44] : memref<1x8x1xf32, #tpu.memory_space<vmem>>, vector<1x8x1xf32>
      tpu.vector_store %arg6[%c0_42, %c0_43, %c0_44], %62 {strides = array<i32>} : memref<1x8x1xf32, #tpu.memory_space<vmem>>, vector<1x8x1xf32>,
      %cst_45 = arith.constant 0.000000e+00 : f32
      %64 = vector.broadcast %cst_45 : f32 to vector<1x8x1xf32>
      %c0_46 = arith.constant 0 : index
      %c0_47 = arith.constant 0 : index
      %c0_48 = arith.constant 0 : index
      %65 = vector.load %arg7[%c0_46, %c0_47, %c0_48] : memref<1x8x1xf32, #tpu.memory_space<vmem>>, vector<1x8x1xf32>
      tpu.vector_store %arg7[%c0_46, %c0_47, %c0_48], %64 {strides = array<i32>} : memref<1x8x1xf32, #tpu.memory_space<vmem>>, vector<1x8x1xf32>,
      %cst_49 = arith.constant 1.000000e+00 : f32
      %66 = vector.broadcast %cst_49 : f32 to vector<1x8x1xf32>
      %c0_50 = arith.constant 0 : index
      %c0_51 = arith.constant 0 : index
      %c0_52 = arith.constant 0 : index
      %67 = vector.load %arg8[%c0_50, %c0_51, %c0_52] : memref<1x8x1xf32, #tpu.memory_space<vmem>>, vector<1x8x1xf32>
      tpu.vector_store %arg8[%c0_50, %c0_51, %c0_52], %66 {strides = array<i32>} : memref<1x8x1xf32, #tpu.memory_space<vmem>>, vector<1x8x1xf32>,
    } else {
    }
    %c0 = arith.constant 0 : index
    %c0_1 = arith.constant 0 : index
    %c0_2 = arith.constant 0 : index
    %3 = vector.load %arg2[%c0, %c0_1, %c0_2] : memref<8x8x32xf32, #tpu.memory_space<vmem>>, vector<8x8x32xf32>
    %4 = vector.shape_cast %3 : vector<8x8x32xf32> to vector<64x32xf32>
    %5 = arith.truncf %4 : vector<64x32xf32> to vector<64x32xbf16>
    %c0_3 = arith.constant 0 : index
    %c0_4 = arith.constant 0 : index
    %6 = vector.load %arg5[%c0_3, %c0_4] : memref<32x128xf32, #tpu.memory_space<vmem>>, vector<32x128xf32>
    %7 = arith.truncf %6 : vector<32x128xf32> to vector<32x128xbf16>
    %cst = arith.constant dense<0.000000e+00> : vector<64x128xf32>
    %8 = tpu.matmul %5, %7, %cst {dimension_numbers = #tpu.dot_dimension_numbers<[1], [0], [0], [1], [0, 0, 1, 1], [], []>} : vector<64x32xbf16>, vector<32x128xbf16>, vector<64x128xf32> -> vector<64x128xf32>
    %9 = vector.shape_cast %8 : vector<64x128xf32> to vector<8x8x128xf32>
    %c0_5 = arith.constant 0 : index
    %c0_6 = arith.constant 0 : index
    %c0_7 = arith.constant 0 : index
    %10 = vector.load %arg3[%c0_5, %c0_6, %c0_7] : memref<8x8x1xi32, #tpu.memory_space<vmem>>, vector<8x8x1xi32>
    %c0_8 = arith.constant 0 : index
    %c0_9 = arith.constant 0 : index
    %c0_10 = arith.constant 0 : index
    %11 = vector.load %arg4[%c0_8, %c0_9, %c0_10] : memref<8x8x1xf32, #tpu.memory_space<vmem>>, vector<8x8x1xf32>
    %cst_11 = arith.constant dense<0xFF800000> : vector<8x8xf32>
    %12 = vector.multi_reduction <maximumf>, %9, %cst_11 [2] : vector<8x8x128xf32> to vector<8x8xf32>
    %13 = vector.shape_cast %12 : vector<8x8xf32> to vector<8x8x1xf32>
    %14 = vector.broadcast %13 : vector<8x8x1xf32> to vector<8x8x128xf32>
    %15 = arith.subf %9, %14 : vector<8x8x128xf32>
    %16 = math.exp %15 : vector<8x8x128xf32>
    %cst_12 = arith.constant dense<0.000000e+00> : vector<8x8xf32>
    %17 = vector.multi_reduction <add>, %16, %cst_12 [2] : vector<8x8x128xf32> to vector<8x8xf32>
    %18 = vector.shape_cast %17 : vector<8x8xf32> to vector<8x8x1xf32>
    %19 = math.log %18 : vector<8x8x1xf32>
    %20 = arith.addf %13, %19 : vector<8x8x1xf32>
    %21 = tpu.iota {dimensions = array<i32: 2>} : vector<1x1x128xi32>
    %22 = vector.broadcast %21 : vector<1x1x128xi32> to vector<8x8x128xi32>
    %23 = vector.broadcast %10 : vector<8x8x1xi32> to vector<8x8x128xi32>
    %24 = arith.cmpi eq, %22, %23 : vector<8x8x128xi32>
    %cst_13 = arith.constant 0.000000e+00 : f32
    %25 = vector.broadcast %cst_13 : f32 to vector<8x8x128xf32>
    %26 = arith.select %24, %9, %25 : vector<8x8x128xi1>, vector<8x8x128xf32>
    %cst_14 = arith.constant dense<0.000000e+00> : vector<8x8xf32>
    %27 = vector.multi_reduction <add>, %26, %cst_14 [2] : vector<8x8x128xf32> to vector<8x8xf32>
    %28 = vector.shape_cast %27 : vector<8x8xf32> to vector<8x8x1xf32>
    %c0_i32_15 = arith.constant 0 : i32
    %29 = vector.broadcast %c0_i32_15 : i32 to vector<8x8x1xi32>
    %30 = arith.cmpi ne, %10, %29 : vector<8x8x1xi32>
    %31 = arith.extui %30 : vector<8x8x1xi1> to vector<8x8x1xi32>
    %32 = arith.sitofp %31 : vector<8x8x1xi32> to vector<8x8x1xf32>
    %33 = arith.subf %20, %28 : vector<8x8x1xf32>
    %34 = arith.mulf %33, %32 : vector<8x8x1xf32>
    %35 = arith.cmpf oge, %28, %13 : vector<8x8x1xf32>
    %36 = arith.extui %35 : vector<8x8x1xi1> to vector<8x8x1xi32>
    %37 = arith.sitofp %36 : vector<8x8x1xi32> to vector<8x8x1xf32>
    %c0_16 = arith.constant 0 : index
    %c0_17 = arith.constant 0 : index
    %c0_18 = arith.constant 0 : index
    %38 = vector.load %arg6[%c0_16, %c0_17, %c0_18] : memref<1x8x1xf32, #tpu.memory_space<vmem>>, vector<1x8x1xf32>
    %39 = arith.mulf %34, %11 : vector<8x8x1xf32>
    %cst_19 = arith.constant dense<0.000000e+00> : vector<8x1xf32>
    %40 = vector.multi_reduction <add>, %39, %cst_19 [0] : vector<8x8x1xf32> to vector<8x1xf32>
    %41 = vector.shape_cast %40 : vector<8x1xf32> to vector<1x8x1xf32>
    %42 = arith.addf %38, %41 : vector<1x8x1xf32>
    %c0_20 = arith.constant 0 : index
    %c0_21 = arith.constant 0 : index
    %c0_22 = arith.constant 0 : index
    %43 = vector.load %arg6[%c0_20, %c0_21, %c0_22] : memref<1x8x1xf32, #tpu.memory_space<vmem>>, vector<1x8x1xf32>
    tpu.vector_store %arg6[%c0_20, %c0_21, %c0_22], %42 {strides = array<i32>} : memref<1x8x1xf32, #tpu.memory_space<vmem>>, vector<1x8x1xf32>,
    %c0_23 = arith.constant 0 : index
    %c0_24 = arith.constant 0 : index
    %c0_25 = arith.constant 0 : index
    %44 = vector.load %arg7[%c0_23, %c0_24, %c0_25] : memref<1x8x1xf32, #tpu.memory_space<vmem>>, vector<1x8x1xf32>
    %cst_26 = arith.constant dense<0.000000e+00> : vector<8x1xf32>
    %45 = vector.multi_reduction <add>, %37, %cst_26 [0] : vector<8x8x1xf32> to vector<8x1xf32>
    %46 = vector.shape_cast %45 : vector<8x1xf32> to vector<1x8x1xf32>
    %47 = arith.addf %44, %46 : vector<1x8x1xf32>
    %c0_27 = arith.constant 0 : index
    %c0_28 = arith.constant 0 : index
    %c0_29 = arith.constant 0 : index
    %48 = vector.load %arg7[%c0_27, %c0_28, %c0_29] : memref<1x8x1xf32, #tpu.memory_space<vmem>>, vector<1x8x1xf32>
    tpu.vector_store %arg7[%c0_27, %c0_28, %c0_29], %47 {strides = array<i32>} : memref<1x8x1xf32, #tpu.memory_space<vmem>>, vector<1x8x1xf32>,
    %cst_30 = arith.constant 0.000000e+00 : f32
    %49 = vector.broadcast %cst_30 : f32 to vector<8x8x1xf32>
    %50 = arith.cmpf ogt, %37, %49 : vector<8x8x1xf32>
    %cst_31 = arith.constant 0.000000e+00 : f32
    %51 = vector.broadcast %cst_31 : f32 to vector<8x8x1xf32>
    %52 = arith.cmpf ole, %11, %51 : vector<8x8x1xf32>
    %53 = arith.ori %50, %52 : vector<8x8x1xi1>
    %cst_32 = arith.constant 1.000000e+00 : f32
    %cst_33 = arith.constant 0.000000e+00 : f32
    %54 = vector.broadcast %cst_32 : f32 to vector<8x8x1xf32>
    %55 = vector.broadcast %cst_33 : f32 to vector<8x8x1xf32>
    %56 = arith.select %53, %54, %55 : vector<8x8x1xi1>, vector<8x8x1xf32>
    %c0_34 = arith.constant 0 : index
    %c0_35 = arith.constant 0 : index
    %c0_36 = arith.constant 0 : index
    %57 = vector.load %arg8[%c0_34, %c0_35, %c0_36] : memref<1x8x1xf32, #tpu.memory_space<vmem>>, vector<1x8x1xf32>
    %cst_37 = arith.constant dense<0x7F800000> : vector<8x1xf32>
    %58 = vector.multi_reduction <minimumf>, %56, %cst_37 [0] : vector<8x8x1xf32> to vector<8x1xf32>
    %59 = vector.shape_cast %58 : vector<8x1xf32> to vector<1x8x1xf32>
    %60 = arith.minimumf %57, %59 : vector<1x8x1xf32>
    %c0_38 = arith.constant 0 : index
    %c0_39 = arith.constant 0 : index
    %c0_40 = arith.constant 0 : index
    %61 = vector.load %arg8[%c0_38, %c0_39, %c0_40] : memref<1x8x1xf32, #tpu.memory_space<vmem>>, vector<1x8x1xf32>
    tpu.vector_store %arg8[%c0_38, %c0_39, %c0_40], %60 {strides = array<i32>} : memref<1x8x1xf32, #tpu.memory_space<vmem>>, vector<1x8x1xf32>,
    return
  }
  func.func @transform_0(%arg0: i32, %arg1: i32) -> (i32, i32, i32) {
    %c0_i32 = arith.constant 0 : i32
    %c0_i32_0 = arith.constant 0 : i32
    return %arg1, %arg0, %c0_i32 : i32, i32, i32
  }
  func.func @transform_1(%arg0: i32, %arg1: i32) -> (i32, i32, i32) {
    %c0_i32 = arith.constant 0 : i32
    %c0_i32_0 = arith.constant 0 : i32
    return %arg1, %arg0, %c0_i32 : i32, i32, i32
  }
  func.func @transform_2(%arg0: i32, %arg1: i32) -> (i32, i32, i32) {
    %c0_i32 = arith.constant 0 : i32
    %c0_i32_0 = arith.constant 0 : i32
    return %arg1, %arg0, %c0_i32 : i32, i32, i32
  }
  func.func @transform_3(%arg0: i32, %arg1: i32) -> (i32, i32) {
    %c0_i32 = arith.constant 0 : i32
    %c0_i32_0 = arith.constant 0 : i32
    %c0_i32_1 = arith.constant 0 : i32
    return %c0_i32, %c0_i32_0 : i32, i32
  }
  func.func @transform_4(%arg0: i32, %arg1: i32) -> (i32, i32, i32) {
    %c0_i32 = arith.constant 0 : i32
    %c0_i32_0 = arith.constant 0 : i32
    %c0_i32_1 = arith.constant 0 : i32
    return %c0_i32, %arg0, %c0_i32_0 : i32, i32, i32
  }
  func.func @transform_5(%arg0: i32, %arg1: i32) -> (i32, i32, i32) {
    %c0_i32 = arith.constant 0 : i32
    %c0_i32_0 = arith.constant 0 : i32
    %c0_i32_1 = arith.constant 0 : i32
    return %c0_i32, %arg0, %c0_i32_0 : i32, i32, i32
  }
  func.func @transform_6(%arg0: i32, %arg1: i32) -> (i32, i32, i32) {
    %c0_i32 = arith.constant 0 : i32
    %c0_i32_0 = arith.constant 0 : i32
    %c0_i32_1 = arith.constant 0 : i32
    return %c0_i32, %arg0, %c0_i32_0 : i32, i32, i32
  }
}

</mosaic_0001>

<llo_original>
// kernel: tpu_custom_call.1
$region0: #{tpu_custom_call.1}
  #allocation0 [shape = 'u32[]', space=smem, size = 0x4, offset = 0x4, fixed_abs, tag = 'smem constant byte address 0x4 - core index']
  #allocation1 [shape = 'u32[144,128]{1,0:T(1,128)}', space=vmem, size = 0x12000, scoped, tag = 'internal scratch']
  %s0 = inlined_call_operand.vmem [shape: f32[8,16,32], index: 0, kind: input, shape index: {}]
  %s1 = inlined_call_operand.vmem [shape: s32[8,16,1], index: 1, kind: input, shape index: {}]
  %s2 = inlined_call_operand.vmem [shape: f32[8,16,1], index: 2, kind: input, shape index: {}]
  %s3 = inlined_call_operand.vmem [shape: f32[32,128], index: 3, kind: input, shape index: {}]
  %s4 = inlined_call_operand.vmem [shape: f32[1,16,1], index: 4, kind: output, shape index: {0}]
  %s5 = inlined_call_operand.vmem [shape: f32[1,16,1], index: 5, kind: output, shape index: {1}]
  %s6 = inlined_call_operand.vmem [shape: f32[1,16,1], index: 6, kind: output, shape index: {2}]
  %7 = xla_tuple %s4, %s5, %s6
  %s8 = sld [smem:[#allocation0]]
  $region183: #{tpu_custom_call.1} parent=0
    _
  %s10 = ssub.s32 1, %s8
  %s11 = scalar_select 0, %s10, %s8
  $region1: #{tpu_custom_call.1} parent=0
    #allocation2 [shape = 'u8[65536]{0}', space=vmem, size = 0x10000, scoped, tag = 'input window, operand 0']
    #allocation3 [shape = 'u8[65536]{0}', space=vmem, size = 0x10000, scoped, tag = 'input window, operand 1']
    #allocation4 [shape = 'u8[65536]{0}', space=vmem, size = 0x10000, scoped, tag = 'input window, operand 2']
    loop: start=0, step=1, limit=4
    $region2: #{tpu_custom_call.1} parent=1 // loop_pre_header
      _
    $region3: #{tpu_custom_call.1} parent=1 // loop_header
      %s13 = sphi 0, %s17
      %p14 = scmp.ge.s32.totalorder %s13, 4
      %s20 = sphi 0, %s32
      %s21 = sphi 0, %s28
      %s22 = sphi 0, %s20
      %s23 = sphi 0, %s21
      %s24 = sphi 0, %s22
      %s25 = sphi 0, %s23
      %s37 = sphi 0, %s39
      %s40 = sphi 0, %s37
      %s41 = sphi 0, %s40
      %s57 = sphi 0, %s41
      %s65 = sphi 0, %s67
      %s68 = sphi 0, %s65
      %s69 = sphi 0, %s68
      %s85 = sphi 0, %s69
      %s93 = sphi 0, %s95
      %s96 = sphi 0, %s93
      %s97 = sphi 0, %s96
      %s113 = sphi 0, %s97
      %s117 = sphi 0, %s117
      %s119 = sphi 0, %s117
      %s120 = sphi 0, %s119
      %s134 = sphi 0, %s120
      %s140 = sphi 0, %s142
      %s143 = sphi 0, %s140
      %s144 = sphi 0, %s143
      %s160 = sphi 0, %s144
      %s166 = sphi 0, %s168
      %s169 = sphi 0, %s166
      %s170 = sphi 0, %s169
      %s186 = sphi 0, %s170
      %s192 = sphi 0, %s194
      %s195 = sphi 0, %s192
      %s196 = sphi 0, %s195
      %s212 = sphi 0, %s196
    $region4: #{tpu_custom_call.1} parent=1 // loop_header_branch
      %16 = sbr.rel (%p14) target = $region8
    $region5: #{tpu_custom_call.1} parent=1 // loop_body
      %s18 = ssub.s32 %s13, 1
      %s19 = ssub.s32 %s13, 2
      %s26 = sadd.s32 1, %s21
      %p27 = scmp.ge.s32.totalorder %s26, 1
      %s28 = scalar_select %p27, 0, %s26
      %s29 = sadd.s32 1, %s20
      %s30 = scalar_select %p27, %s29, %s20
      %p31 = scmp.ge.s32.totalorder %s30, 2
      %s32 = scalar_select %p31, 0, %s30
      %s33 = ssub.s32 %s21, %s28
      %s34 = ssub.s32 %s20, %s32
      %s35 = sor.u32 %s33, %s34
      %p36 = scmp.eq.s32.totalorder %s35, 0
      %s38 = sadd.s32 %s37, 1
      %s39 = scalar_select %p36, %s37, %s38
      %p42 = pneg %p36
      %p43 = scmp.eq.s32.totalorder %s13, 1
      %p44 = por %p42, %p43
      %p45 = scmp.ne.s32.totalorder %s37, %s40
      %p46 = scmp.eq.s32.totalorder %s13, 0
      %p47 = por %p45, %p46
      %p48 = scmp.ne.s32.totalorder %s37, %s40
      %p49 = scmp.eq.s32.totalorder %s18, 1
      %p50 = por %p48, %p49
      %p51 = scmp.ne.s32.totalorder %s40, %s41
      %p52 = scmp.eq.s32.totalorder %s18, 0
      %p53 = por %p51, %p52
      %p54 = scmp.ne.s32.totalorder %s40, %s41
      %p55 = scmp.eq.s32.totalorder %s19, 1
      %p56 = por %p54, %p55
      %p58 = scmp.ne.s32.totalorder %s41, %s57
      %p59 = scmp.eq.s32.totalorder %s19, 0
      %p60 = por %p58, %p59
      %s61 = ssub.s32 %s21, %s28
      %s62 = ssub.s32 %s20, %s32
      %s63 = sor.u32 %s61, %s62
      %p64 = scmp.eq.s32.totalorder %s63, 0
      %s66 = sadd.s32 %s65, 1
      %s67 = scalar_select %p64, %s65, %s66
      %p70 = pneg %p64
      %p71 = scmp.eq.s32.totalorder %s13, 1
      %p72 = por %p70, %p71
      %p73 = scmp.ne.s32.totalorder %s65, %s68
      %p74 = scmp.eq.s32.totalorder %s13, 0
      %p75 = por %p73, %p74
      %p76 = scmp.ne.s32.totalorder %s65, %s68
      %p77 = scmp.eq.s32.totalorder %s18, 1
      %p78 = por %p76, %p77
      %p79 = scmp.ne.s32.totalorder %s68, %s69
      %p80 = scmp.eq.s32.totalorder %s18, 0
      %p81 = por %p79, %p80
      %p82 = scmp.ne.s32.totalorder %s68, %s69
      %p83 = scmp.eq.s32.totalorder %s19, 1
      %p84 = por %p82, %p83
      %p86 = scmp.ne.s32.totalorder %s69, %s85
      %p87 = scmp.eq.s32.totalorder %s19, 0
      %p88 = por %p86, %p87
      %s89 = ssub.s32 %s21, %s28
      %s90 = ssub.s32 %s20, %s32
      %s91 = sor.u32 %s89, %s90
      %p92 = scmp.eq.s32.totalorder %s91, 0
      %s94 = sadd.s32 %s93, 1
      %s95 = scalar_select %p92, %s93, %s94
      %p98 = pneg %p92
      %p99 = scmp.eq.s32.totalorder %s13, 1
      %p100 = por %p98, %p99
      %p101 = scmp.ne.s32.totalorder %s93, %s96
      %p102 = scmp.eq.s32.totalorder %s13, 0
      %p103 = por %p101, %p102
      %p104 = scmp.ne.s32.totalorder %s93, %s96
      %p105 = scmp.eq.s32.totalorder %s18, 1
      %p106 = por %p104, %p105
      %p107 = scmp.ne.s32.totalorder %s96, %s97
      %p108 = scmp.eq.s32.totalorder %s18, 0
      %p109 = por %p107, %p108
      %p110 = scmp.ne.s32.totalorder %s96, %s97
      %p111 = scmp.eq.s32.totalorder %s19, 1
      %p112 = por %p110, %p111
      %p114 = scmp.ne.s32.totalorder %s97, %s113
      %p115 = scmp.eq.s32.totalorder %s19, 0
      %p116 = por %p114, %p115
      %s118 = sadd.s32 %s117, 1
      %p121 = scmp.eq.s32.totalorder %s13, 1
      %p122 = scmp.ne.s32.totalorder %s117, %s119
      %p123 = scmp.eq.s32.totalorder %s13, 0
      %p124 = por %p122, %p123
      %p125 = scmp.ne.s32.totalorder %s117, %s119
      %p126 = scmp.eq.s32.totalorder %s18, 1
      %p127 = por %p125, %p126
      %p128 = scmp.ne.s32.totalorder %s119, %s120
      %p129 = scmp.eq.s32.totalorder %s18, 0
      %p130 = por %p128, %p129
      %p131 = scmp.ne.s32.totalorder %s119, %s120
      %p132 = scmp.eq.s32.totalorder %s19, 1
      %p133 = por %p131, %p132
      %p135 = scmp.ne.s32.totalorder %s120, %s134
      %p136 = scmp.eq.s32.totalorder %s19, 0
      %p137 = por %p135, %p136
      %s138 = ssub.s32 %s20, %s32
      %p139 = scmp.eq.s32.totalorder %s138, 0
      %s141 = sadd.s32 %s140, 1
      %s142 = scalar_select %p139, %s140, %s141
      %p145 = pneg %p139
      %p146 = scmp.eq.s32.totalorder %s13, 1
      %p147 = por %p145, %p146
      %p148 = scmp.ne.s32.totalorder %s140, %s143
      %p149 = scmp.eq.s32.totalorder %s13, 0
      %p150 = por %p148, %p149
      %p151 = scmp.ne.s32.totalorder %s140, %s143
      %p152 = scmp.eq.s32.totalorder %s18, 1
      %p153 = por %p151, %p152
      %p154 = scmp.ne.s32.totalorder %s143, %s144
      %p155 = scmp.eq.s32.totalorder %s18, 0
      %p156 = por %p154, %p155
      %p157 = scmp.ne.s32.totalorder %s143, %s144
      %p158 = scmp.eq.s32.totalorder %s19, 1
      %p159 = por %p157, %p158
      %p161 = scmp.ne.s32.totalorder %s144, %s160
      %p162 = scmp.eq.s32.totalorder %s19, 0
      %p163 = por %p161, %p162
      %s164 = ssub.s32 %s20, %s32
      %p165 = scmp.eq.s32.totalorder %s164, 0
      %s167 = sadd.s32 %s166, 1
      %s168 = scalar_select %p165, %s166, %s167
      %p171 = pneg %p165
      %p172 = scmp.eq.s32.totalorder %s13, 1
      %p173 = por %p171, %p172
      %p174 = scmp.ne.s32.totalorder %s166, %s169
      %p175 = scmp.eq.s32.totalorder %s13, 0
      %p176 = por %p174, %p175
      %p177 = scmp.ne.s32.totalorder %s166, %s169
      %p178 = scmp.eq.s32.totalorder %s18, 1
      %p179 = por %p177, %p178
      %p180 = scmp.ne.s32.totalorder %s169, %s170
      %p181 = scmp.eq.s32.totalorder %s18, 0
      %p182 = por %p180, %p181
      %p183 = scmp.ne.s32.totalorder %s169, %s170
      %p184 = scmp.eq.s32.totalorder %s19, 1
      %p185 = por %p183, %p184
      %p187 = scmp.ne.s32.totalorder %s170, %s186
      %p188 = scmp.eq.s32.totalorder %s19, 0
      %p189 = por %p187, %p188
      %s190 = ssub.s32 %s20, %s32
      %p191 = scmp.eq.s32.totalorder %s190, 0
      %s193 = sadd.s32 %s192, 1
      %s194 = scalar_select %p191, %s192, %s193
      %p197 = pneg %p191
      %p198 = scmp.eq.s32.totalorder %s13, 1
      %p199 = por %p197, %p198
      %p200 = scmp.ne.s32.totalorder %s192, %s195
      %p201 = scmp.eq.s32.totalorder %s13, 0
      %p202 = por %p200, %p201
      %p203 = scmp.ne.s32.totalorder %s192, %s195
      %p204 = scmp.eq.s32.totalorder %s18, 1
      %p205 = por %p203, %p204
      %p206 = scmp.ne.s32.totalorder %s195, %s196
      %p207 = scmp.eq.s32.totalorder %s18, 0
      %p208 = por %p206, %p207
      %p209 = scmp.ne.s32.totalorder %s195, %s196
      %p210 = scmp.eq.s32.totalorder %s19, 1
      %p211 = por %p209, %p210
      %p213 = scmp.ne.s32.totalorder %s196, %s212
      %p214 = scmp.eq.s32.totalorder %s19, 0
      %p215 = por %p213, %p214
      %p216 = scmp.le.s32.totalorder 1, %s13
      %p217 = scmp.lt.s32.totalorder %s13, 3
      %p218 = pnand %p216, %p217
      %p219 = pneg %p218
      // Predicated region
      $region9: #{tpu_custom_call.1} parent=5 // pred_check
        _
      $region10: #{tpu_custom_call.1} parent=5 // pred_check_branch
        %221 = sbr.rel (%p218) target = $region12
      $region11: #{tpu_custom_call.1} parent=5 // pred_region
        %s222 = ssub.s32 %s13, 1
        // Predicated region
        $region13: #{tpu_custom_call.1} parent=11 // pred_check
          %p223 = pneg %p130
        $region14: #{tpu_custom_call.1} parent=11 // pred_check_branch
          %225 = sbr.rel (%p223) target = $region16
        $region15: #{tpu_custom_call.1} parent=11 // pred_region
          _
        $region16: #{tpu_custom_call.1} parent=11 // pred_fallthru
          _
      $region12: #{tpu_custom_call.1} parent=5 // pred_fallthru
        _
      %p226 = scmp.lt.s32.totalorder %s13, 2
      // Predicated region
      $region17: #{tpu_custom_call.1} parent=5 // pred_check
        %p227 = pneg %p226
      $region18: #{tpu_custom_call.1} parent=5 // pred_check_branch
        %229 = sbr.rel (%p227) target = $region20
      $region19: #{tpu_custom_call.1} parent=5 // pred_region
        // Predicated region
        $region21: #{tpu_custom_call.1} parent=19 // pred_check
          %p230 = pneg %p47
        $region22: #{tpu_custom_call.1} parent=19 // pred_check_branch
          %232 = sbr.rel (%p230) target = $region24
        $region23: #{tpu_custom_call.1} parent=19 // pred_region
          %s233 = sand.u32 %s37, 1
          %s234 = sand.u32 %s37, 1
          %s235 = smul.addr %s234, 64
          %s236 = scalar_lea.vmem [#allocation2], %s235
          %s237 = smul.u32 8, %s21
          %s238 = smul.addr %s237, 2
          %s239 = sadd.s32 %s20, %s238
          %s240 = smul.addr %s239, 8
          %s241 = scalar_lea.vmem %s0, %s240
          // Predicated region
          $region25: #{tpu_custom_call.1} parent=23 // pred_check
            _
          $region26: #{tpu_custom_call.1} parent=23 // pred_check_branch
            %243 = sbr.rel (0) target = $region28
          $region27: #{tpu_custom_call.1} parent=23 // pred_region
            // Predicated region
            $region29: #{tpu_custom_call.1} parent=27 // pred_check
              _
            $region30: #{tpu_custom_call.1} parent=27 // pred_check_branch
              %245 = sbr.rel (0) target = $region32
            $region31: #{tpu_custom_call.1} parent=27 // pred_region
              // Predicated region
              $region44: #{tpu_custom_call.1} parent=31 // pred_check
                _
              $region45: #{tpu_custom_call.1} parent=31 // pred_check_branch
                %275 = sbr.rel (0) target = $region47
              $region46: #{tpu_custom_call.1} parent=31 // pred_region
                loop: start=0, step=1, limit=1
                $region48: #{tpu_custom_call.1} parent=46 // loop_pre_header
                  _
                $region49: #{tpu_custom_call.1} parent=46 // loop_header
                  %s277 = sphi 0, %s281
                  %p278 = scmp.ge.s32.totalorder %s277, 1
                  %s282 = sphi %s241, %s241
                  %s283 = sphi %s236, %s236
                $region50: #{tpu_custom_call.1} parent=46 // loop_header_branch
                  %280 = sbr.rel (%p278) target = $region54
                $region51: #{tpu_custom_call.1} parent=46 // loop_body
                  %v284 = vld [vmem:[%s282] sm:$0xff]
                  %285 = vst [vmem:[%s283] sm:$0xff] %v284
                  %v286 = vld [vmem:[%s282 + $0x10] sm:$0xff]
                  %287 = vst [vmem:[%s283 + $0x8] sm:$0xff] %v286
                  %v288 = vld [vmem:[%s282 + $0x20] sm:$0xff]
                  %289 = vst [vmem:[%s283 + $0x10] sm:$0xff] %v288
                  %v290 = vld [vmem:[%s282 + $0x30] sm:$0xff]
                  %291 = vst [vmem:[%s283 + $0x18] sm:$0xff] %v290
                  %v292 = vld [vmem:[%s282 + $0x40] sm:$0xff]
                  %293 = vst [vmem:[%s283 + $0x20] sm:$0xff] %v292
                  %v294 = vld [vmem:[%s282 + $0x50] sm:$0xff]
                  %295 = vst [vmem:[%s283 + $0x28] sm:$0xff] %v294
                  %v296 = vld [vmem:[%s282 + $0x60] sm:$0xff]
                  %297 = vst [vmem:[%s283 + $0x30] sm:$0xff] %v296
                  %v298 = vld [vmem:[%s282 + $0x70] sm:$0xff]
                  %299 = vst [vmem:[%s283 + $0x38] sm:$0xff] %v298
                $region52: #{tpu_custom_call.1} parent=46 // loop_footer
                  %s281 = sadd.s32 1, %s277
                $region53: #{tpu_custom_call.1} parent=46 // loop_footer_branch
                  %276 = sbr.rel target = $region49
                $region54: #{tpu_custom_call.1} parent=46 // loop_exit
                  _
              $region47: #{tpu_custom_call.1} parent=31 // pred_fallthru
                _
              // Predicated region
              $region55: #{tpu_custom_call.1} parent=31 // pred_check
                _
              $region56: #{tpu_custom_call.1} parent=31 // pred_check_branch
                %301 = sbr.rel target = $region58
              $region57: #{tpu_custom_call.1} parent=31 // pred_region
                _
              $region58: #{tpu_custom_call.1} parent=31 // pred_fallthru
                _
            $region32: #{tpu_custom_call.1} parent=27 // pred_fallthru
              _
            // Predicated region
            $region33: #{tpu_custom_call.1} parent=27 // pred_check
              _
            $region34: #{tpu_custom_call.1} parent=27 // pred_check_branch
              %247 = sbr.rel target = $region36
            $region35: #{tpu_custom_call.1} parent=27 // pred_region
              %s249 = ssub.s32 256, 1
              loop: start=0, step=1, limit=1
              $region37: #{tpu_custom_call.1} parent=35 // loop_pre_header
                _
              $region38: #{tpu_custom_call.1} parent=35 // loop_header
                %s251 = sphi 0, %s255
                %p252 = scmp.ge.s32.totalorder %s251, 1
                %s256 = sphi %s241, %s241
                %s257 = sphi %s236, %s236
              $region39: #{tpu_custom_call.1} parent=35 // loop_header_branch
                %254 = sbr.rel (%p252) target = $region43
              $region40: #{tpu_custom_call.1} parent=35 // loop_body
                %v258 = vld [vmem:[%s256] sm:%s249]
                %259 = vst [vmem:[%s257] sm:%s249] %v258
                %v260 = vld [vmem:[%s256 + $0x10] sm:%s249]
                %261 = vst [vmem:[%s257 + $0x8] sm:%s249] %v260
                %v262 = vld [vmem:[%s256 + $0x20] sm:%s249]
                %263 = vst [vmem:[%s257 + $0x10] sm:%s249] %v262
                %v264 = vld [vmem:[%s256 + $0x30] sm:%s249]
                %265 = vst [vmem:[%s257 + $0x18] sm:%s249] %v264
                %v266 = vld [vmem:[%s256 + $0x40] sm:%s249]
                %267 = vst [vmem:[%s257 + $0x20] sm:%s249] %v266
                %v268 = vld [vmem:[%s256 + $0x50] sm:%s249]
                %269 = vst [vmem:[%s257 + $0x28] sm:%s249] %v268
                %v270 = vld [vmem:[%s256 + $0x60] sm:%s249]
                %271 = vst [vmem:[%s257 + $0x30] sm:%s249] %v270
                %v272 = vld [vmem:[%s256 + $0x70] sm:%s249]
                %273 = vst [vmem:[%s257 + $0x38] sm:%s249] %v272
              $region41: #{tpu_custom_call.1} parent=35 // loop_footer
                %s255 = sadd.s32 1, %s251
              $region42: #{tpu_custom_call.1} parent=35 // loop_footer_branch
                %250 = sbr.rel target = $region38
              $region43: #{tpu_custom_call.1} parent=35 // loop_exit
                _
            $region36: #{tpu_custom_call.1} parent=27 // pred_fallthru
              _
          $region28: #{tpu_custom_call.1} parent=23 // pred_fallthru
            _
          %302 = vnop
        $region24: #{tpu_custom_call.1} parent=19 // pred_fallthru
          _
        // Predicated region
        $region59: #{tpu_custom_call.1} parent=19 // pred_check
          %p303 = pneg %p75
        $region60: #{tpu_custom_call.1} parent=19 // pred_check_branch
          %305 = sbr.rel (%p303) target = $region62
        $region61: #{tpu_custom_call.1} parent=19 // pred_region
          %s306 = sand.u32 %s65, 1
          %s307 = sand.u32 %s65, 1
          %s308 = smul.addr %s307, 64
          %s309 = scalar_lea.vmem [#allocation3], %s308
          %s310 = smul.u32 8, %s21
          %s311 = smul.addr %s310, 2
          %s312 = sadd.s32 %s20, %s311
          %s313 = smul.addr %s312, 8
          %s314 = scalar_lea.vmem %s1, %s313
          // Predicated region
          $region63: #{tpu_custom_call.1} parent=61 // pred_check
            _
          $region64: #{tpu_custom_call.1} parent=61 // pred_check_branch
            %316 = sbr.rel (0) target = $region66
          $region65: #{tpu_custom_call.1} parent=61 // pred_region
            // Predicated region
            $region67: #{tpu_custom_call.1} parent=65 // pred_check
              _
            $region68: #{tpu_custom_call.1} parent=65 // pred_check_branch
              %318 = sbr.rel (0) target = $region70
            $region69: #{tpu_custom_call.1} parent=65 // pred_region
              // Predicated region
              $region82: #{tpu_custom_call.1} parent=69 // pred_check
                _
              $region83: #{tpu_custom_call.1} parent=69 // pred_check_branch
                %348 = sbr.rel (0) target = $region85
              $region84: #{tpu_custom_call.1} parent=69 // pred_region
                loop: start=0, step=1, limit=1
                $region86: #{tpu_custom_call.1} parent=84 // loop_pre_header
                  _
                $region87: #{tpu_custom_call.1} parent=84 // loop_header
                  %s350 = sphi 0, %s354
                  %p351 = scmp.ge.s32.totalorder %s350, 1
                  %s355 = sphi %s314, %s314
                  %s356 = sphi %s309, %s309
                $region88: #{tpu_custom_call.1} parent=84 // loop_header_branch
                  %353 = sbr.rel (%p351) target = $region92
                $region89: #{tpu_custom_call.1} parent=84 // loop_body
                  %v357 = vld [vmem:[%s355] sm:$0xff]
                  %358 = vst [vmem:[%s356] sm:$0xff] %v357
                  %v359 = vld [vmem:[%s355 + $0x10] sm:$0xff]
                  %360 = vst [vmem:[%s356 + $0x8] sm:$0xff] %v359
                  %v361 = vld [vmem:[%s355 + $0x20] sm:$0xff]
                  %362 = vst [vmem:[%s356 + $0x10] sm:$0xff] %v361
                  %v363 = vld [vmem:[%s355 + $0x30] sm:$0xff]
                  %364 = vst [vmem:[%s356 + $0x18] sm:$0xff] %v363
                  %v365 = vld [vmem:[%s355 + $0x40] sm:$0xff]
                  %366 = vst [vmem:[%s356 + $0x20] sm:$0xff] %v365
                  %v367 = vld [vmem:[%s355 + $0x50] sm:$0xff]
                  %368 = vst [vmem:[%s356 + $0x28] sm:$0xff] %v367
                  %v369 = vld [vmem:[%s355 + $0x60] sm:$0xff]
                  %370 = vst [vmem:[%s356 + $0x30] sm:$0xff] %v369
                  %v371 = vld [vmem:[%s355 + $0x70] sm:$0xff]
                  %372 = vst [vmem:[%s356 + $0x38] sm:$0xff] %v371
                $region90: #{tpu_custom_call.1} parent=84 // loop_footer
                  %s354 = sadd.s32 1, %s350
                $region91: #{tpu_custom_call.1} parent=84 // loop_footer_branch
                  %349 = sbr.rel target = $region87
                $region92: #{tpu_custom_call.1} parent=84 // loop_exit
                  _
              $region85: #{tpu_custom_call.1} parent=69 // pred_fallthru
                _
              // Predicated region
              $region93: #{tpu_custom_call.1} parent=69 // pred_check
                _
              $region94: #{tpu_custom_call.1} parent=69 // pred_check_branch
                %374 = sbr.rel target = $region96
              $region95: #{tpu_custom_call.1} parent=69 // pred_region
                _
              $region96: #{tpu_custom_call.1} parent=69 // pred_fallthru
                _
            $region70: #{tpu_custom_call.1} parent=65 // pred_fallthru
              _
            // Predicated region
            $region71: #{tpu_custom_call.1} parent=65 // pred_check
              _
            $region72: #{tpu_custom_call.1} parent=65 // pred_check_branch
              %320 = sbr.rel target = $region74
            $region73: #{tpu_custom_call.1} parent=65 // pred_region
              %s322 = ssub.s32 256, 1
              loop: start=0, step=1, limit=1
              $region75: #{tpu_custom_call.1} parent=73 // loop_pre_header
                _
              $region76: #{tpu_custom_call.1} parent=73 // loop_header
                %s324 = sphi 0, %s328
                %p325 = scmp.ge.s32.totalorder %s324, 1
                %s329 = sphi %s314, %s314
                %s330 = sphi %s309, %s309
              $region77: #{tpu_custom_call.1} parent=73 // loop_header_branch
                %327 = sbr.rel (%p325) target = $region81
              $region78: #{tpu_custom_call.1} parent=73 // loop_body
                %v331 = vld [vmem:[%s329] sm:%s322]
                %332 = vst [vmem:[%s330] sm:%s322] %v331
                %v333 = vld [vmem:[%s329 + $0x10] sm:%s322]
                %334 = vst [vmem:[%s330 + $0x8] sm:%s322] %v333
                %v335 = vld [vmem:[%s329 + $0x20] sm:%s322]
                %336 = vst [vmem:[%s330 + $0x10] sm:%s322] %v335
                %v337 = vld [vmem:[%s329 + $0x30] sm:%s322]
                %338 = vst [vmem:[%s330 + $0x18] sm:%s322] %v337
                %v339 = vld [vmem:[%s329 + $0x40] sm:%s322]
                %340 = vst [vmem:[%s330 + $0x20] sm:%s322] %v339
                %v341 = vld [vmem:[%s329 + $0x50] sm:%s322]
                %342 = vst [vmem:[%s330 + $0x28] sm:%s322] %v341
                %v343 = vld [vmem:[%s329 + $0x60] sm:%s322]
                %344 = vst [vmem:[%s330 + $0x30] sm:%s322] %v343
                %v345 = vld [vmem:[%s329 + $0x70] sm:%s322]
                %346 = vst [vmem:[%s330 + $0x38] sm:%s322] %v345
              $region79: #{tpu_custom_call.1} parent=73 // loop_footer
                %s328 = sadd.s32 1, %s324
              $region80: #{tpu_custom_call.1} parent=73 // loop_footer_branch
                %323 = sbr.rel target = $region76
              $region81: #{tpu_custom_call.1} parent=73 // loop_exit
                _
            $region74: #{tpu_custom_call.1} parent=65 // pred_fallthru
              _
          $region66: #{tpu_custom_call.1} parent=61 // pred_fallthru
            _
          %375 = vnop
        $region62: #{tpu_custom_call.1} parent=19 // pred_fallthru
          _
        // Predicated region
        $region97: #{tpu_custom_call.1} parent=19 // pred_check
          %p376 = pneg %p103
        $region98: #{tpu_custom_call.1} parent=19 // pred_check_branch
          %378 = sbr.rel (%p376) target = $region100
        $region99: #{tpu_custom_call.1} parent=19 // pred_region
          %s379 = sand.u32 %s93, 1
          %s380 = sand.u32 %s93, 1
          %s381 = smul.addr %s380, 64
          %s382 = scalar_lea.vmem [#allocation4], %s381
          %s383 = smul.u32 8, %s21
          %s384 = smul.addr %s383, 2
          %s385 = sadd.s32 %s20, %s384
          %s386 = smul.addr %s385, 8
          %s387 = scalar_lea.vmem %s2, %s386
          // Predicated region
          $region101: #{tpu_custom_call.1} parent=99 // pred_check
            _
          $region102: #{tpu_custom_call.1} parent=99 // pred_check_branch
            %389 = sbr.rel (0) target = $region104
          $region103: #{tpu_custom_call.1} parent=99 // pred_region
            // Predicated region
            $region105: #{tpu_custom_call.1} parent=103 // pred_check
              _
            $region106: #{tpu_custom_call.1} parent=103 // pred_check_branch
              %391 = sbr.rel (0) target = $region108
            $region107: #{tpu_custom_call.1} parent=103 // pred_region
              // Predicated region
              $region120: #{tpu_custom_call.1} parent=107 // pred_check
                _
              $region121: #{tpu_custom_call.1} parent=107 // pred_check_branch
                %421 = sbr.rel (0) target = $region123
              $region122: #{tpu_custom_call.1} parent=107 // pred_region
                loop: start=0, step=1, limit=1
                $region124: #{tpu_custom_call.1} parent=122 // loop_pre_header
                  _
                $region125: #{tpu_custom_call.1} parent=122 // loop_header
                  %s423 = sphi 0, %s427
                  %p424 = scmp.ge.s32.totalorder %s423, 1
                  %s428 = sphi %s387, %s387
                  %s429 = sphi %s382, %s382
                $region126: #{tpu_custom_call.1} parent=122 // loop_header_branch
                  %426 = sbr.rel (%p424) target = $region130
                $region127: #{tpu_custom_call.1} parent=122 // loop_body
                  %v430 = vld [vmem:[%s428] sm:$0xff]
                  %431 = vst [vmem:[%s429] sm:$0xff] %v430
                  %v432 = vld [vmem:[%s428 + $0x10] sm:$0xff]
                  %433 = vst [vmem:[%s429 + $0x8] sm:$0xff] %v432
                  %v434 = vld [vmem:[%s428 + $0x20] sm:$0xff]
                  %435 = vst [vmem:[%s429 + $0x10] sm:$0xff] %v434
                  %v436 = vld [vmem:[%s428 + $0x30] sm:$0xff]
                  %437 = vst [vmem:[%s429 + $0x18] sm:$0xff] %v436
                  %v438 = vld [vmem:[%s428 + $0x40] sm:$0xff]
                  %439 = vst [vmem:[%s429 + $0x20] sm:$0xff] %v438
                  %v440 = vld [vmem:[%s428 + $0x50] sm:$0xff]
                  %441 = vst [vmem:[%s429 + $0x28] sm:$0xff] %v440
                  %v442 = vld [vmem:[%s428 + $0x60] sm:$0xff]
                  %443 = vst [vmem:[%s429 + $0x30] sm:$0xff] %v442
                  %v444 = vld [vmem:[%s428 + $0x70] sm:$0xff]
                  %445 = vst [vmem:[%s429 + $0x38] sm:$0xff] %v444
                $region128: #{tpu_custom_call.1} parent=122 // loop_footer
                  %s427 = sadd.s32 1, %s423
                $region129: #{tpu_custom_call.1} parent=122 // loop_footer_branch
                  %422 = sbr.rel target = $region125
                $region130: #{tpu_custom_call.1} parent=122 // loop_exit
                  _
              $region123: #{tpu_custom_call.1} parent=107 // pred_fallthru
                _
              // Predicated region
              $region131: #{tpu_custom_call.1} parent=107 // pred_check
                _
              $region132: #{tpu_custom_call.1} parent=107 // pred_check_branch
                %447 = sbr.rel target = $region134
              $region133: #{tpu_custom_call.1} parent=107 // pred_region
                _
              $region134: #{tpu_custom_call.1} parent=107 // pred_fallthru
                _
            $region108: #{tpu_custom_call.1} parent=103 // pred_fallthru
              _
            // Predicated region
            $region109: #{tpu_custom_call.1} parent=103 // pred_check
              _
            $region110: #{tpu_custom_call.1} parent=103 // pred_check_branch
              %393 = sbr.rel target = $region112
            $region111: #{tpu_custom_call.1} parent=103 // pred_region
              %s395 = ssub.s32 256, 1
              loop: start=0, step=1, limit=1
              $region113: #{tpu_custom_call.1} parent=111 // loop_pre_header
                _
              $region114: #{tpu_custom_call.1} parent=111 // loop_header
                %s397 = sphi 0, %s401
                %p398 = scmp.ge.s32.totalorder %s397, 1
                %s402 = sphi %s387, %s387
                %s403 = sphi %s382, %s382
              $region115: #{tpu_custom_call.1} parent=111 // loop_header_branch
                %400 = sbr.rel (%p398) target = $region119
              $region116: #{tpu_custom_call.1} parent=111 // loop_body
                %v404 = vld [vmem:[%s402] sm:%s395]
                %405 = vst [vmem:[%s403] sm:%s395] %v404
                %v406 = vld [vmem:[%s402 + $0x10] sm:%s395]
                %407 = vst [vmem:[%s403 + $0x8] sm:%s395] %v406
                %v408 = vld [vmem:[%s402 + $0x20] sm:%s395]
                %409 = vst [vmem:[%s403 + $0x10] sm:%s395] %v408
                %v410 = vld [vmem:[%s402 + $0x30] sm:%s395]
                %411 = vst [vmem:[%s403 + $0x18] sm:%s395] %v410
                %v412 = vld [vmem:[%s402 + $0x40] sm:%s395]
                %413 = vst [vmem:[%s403 + $0x20] sm:%s395] %v412
                %v414 = vld [vmem:[%s402 + $0x50] sm:%s395]
                %415 = vst [vmem:[%s403 + $0x28] sm:%s395] %v414
                %v416 = vld [vmem:[%s402 + $0x60] sm:%s395]
                %417 = vst [vmem:[%s403 + $0x30] sm:%s395] %v416
                %v418 = vld [vmem:[%s402 + $0x70] sm:%s395]
                %419 = vst [vmem:[%s403 + $0x38] sm:%s395] %v418
              $region117: #{tpu_custom_call.1} parent=111 // loop_footer
                %s401 = sadd.s32 1, %s397
              $region118: #{tpu_custom_call.1} parent=111 // loop_footer_branch
                %396 = sbr.rel target = $region114
              $region119: #{tpu_custom_call.1} parent=111 // loop_exit
                _
            $region112: #{tpu_custom_call.1} parent=103 // pred_fallthru
              _
          $region104: #{tpu_custom_call.1} parent=99 // pred_fallthru
            _
          %448 = vnop
        $region100: #{tpu_custom_call.1} parent=19 // pred_fallthru
          _
      $region20: #{tpu_custom_call.1} parent=5 // pred_fallthru
        _
      %p449 = scmp.le.s32.totalorder 1, %s13
      %p450 = scmp.lt.s32.totalorder %s13, 3
      %p451 = pnand %p449, %p450
      %p452 = pneg %p451
      // Predicated region
      $region135: #{tpu_custom_call.1} parent=5 // pred_check
        _
      $region136: #{tpu_custom_call.1} parent=5 // pred_check_branch
        %454 = sbr.rel (%p451) target = $region138
      $region137: #{tpu_custom_call.1} parent=5 // pred_region
        %s455 = ssub.s32 %s13, 1
        %s456 = sand.u32 %s40, 1
        %s457 = sand.u32 %s40, 1
        %s458 = smul.addr %s457, 64
        %s459 = scalar_lea.vmem [#allocation2], %s458
        // Predicated region
        $region139: #{tpu_custom_call.1} parent=137 // pred_check
          %p460 = pneg %p53
        $region140: #{tpu_custom_call.1} parent=137 // pred_check_branch
          %462 = sbr.rel (%p460) target = $region142
        $region141: #{tpu_custom_call.1} parent=137 // pred_region
          _
        $region142: #{tpu_custom_call.1} parent=137 // pred_fallthru
          _
        %s463 = sand.u32 %s68, 1
        %s464 = sand.u32 %s68, 1
        %s465 = smul.addr %s464, 64
        %s466 = scalar_lea.vmem [#allocation3], %s465
        // Predicated region
        $region143: #{tpu_custom_call.1} parent=137 // pred_check
          %p467 = pneg %p81
        $region144: #{tpu_custom_call.1} parent=137 // pred_check_branch
          %469 = sbr.rel (%p467) target = $region146
        $region145: #{tpu_custom_call.1} parent=137 // pred_region
          _
        $region146: #{tpu_custom_call.1} parent=137 // pred_fallthru
          _
        %s470 = sand.u32 %s96, 1
        %s471 = sand.u32 %s96, 1
        %s472 = smul.addr %s471, 64
        %s473 = scalar_lea.vmem [#allocation4], %s472
        // Predicated region
        $region147: #{tpu_custom_call.1} parent=137 // pred_check
          %p474 = pneg %p109
        $region148: #{tpu_custom_call.1} parent=137 // pred_check_branch
          %476 = sbr.rel (%p474) target = $region150
        $region149: #{tpu_custom_call.1} parent=137 // pred_region
          _
        $region150: #{tpu_custom_call.1} parent=137 // pred_fallthru
          _
        %s477 = sand.u32 %s40, 1
        %s478 = sand.u32 %s40, 1
        %s479 = smul.addr %s478, 64
        %s480 = scalar_lea.vmem [#allocation2], %s479
        %p481 = pneg %p53
        %p482 = pneg %p50
        %s483 = sand.u32 %s68, 1
        %s484 = sand.u32 %s68, 1
        %s485 = smul.addr %s484, 64
        %s486 = scalar_lea.vmem [#allocation3], %s485
        %p487 = pneg %p81
        %p488 = pneg %p78
        %s489 = sand.u32 %s96, 1
        %s490 = sand.u32 %s96, 1
        %s491 = smul.addr %s490, 64
        %s492 = scalar_lea.vmem [#allocation4], %s491
        %p493 = pneg %p109
        %p494 = pneg %p106
        %p495 = pneg %p130
        %p496 = pneg %p127
        %p497 = pneg %p156
        %p498 = pneg %p153
        %p499 = scmp.lt.s32.totalorder %s22, 1
        %s500 = scalar_select %p499, %s22, 1
        %s501 = smul.addr %s500, 8
        %s502 = scalar_lea.vmem %s4, %s501
        %p503 = pneg %p182
        %p504 = pneg %p179
        %p505 = scmp.lt.s32.totalorder %s22, 1
        %s506 = scalar_select %p505, %s22, 1
        %s507 = smul.addr %s506, 8
        %s508 = scalar_lea.vmem %s5, %s507
        %p509 = pneg %p208
        %p510 = pneg %p205
        %p511 = scmp.lt.s32.totalorder %s22, 1
        %s512 = scalar_select %p511, %s22, 1
        %s513 = smul.addr %s512, 8
        %s514 = scalar_lea.vmem %s6, %s513
        %s515 = smul.u32 8, %s23
        %s516 = smul.u32 8, %s23
        %s517 = smul.u32 8, %s23
        %p518 = scmp.lt.s32.totalorder %s22, 1
        %s519 = scalar_select %p518, %s22, 1
        %s520 = smul.addr %s519, 8
        %s521 = scalar_lea.vmem %s4, %s520
        %p522 = scmp.lt.s32.totalorder %s22, 1
        %s523 = scalar_select %p522, %s22, 1
        %s524 = smul.addr %s523, 8
        %s525 = scalar_lea.vmem %s5, %s524
        %p526 = scmp.lt.s32.totalorder %s22, 1
        %s527 = scalar_select %p526, %s22, 1
        %s528 = smul.addr %s527, 8
        %s529 = scalar_lea.vmem %s6, %s528
        %p531 = scmp.eq.s32.totalorder %s23, 0
        // Predicated region
        $region151: #{tpu_custom_call.1} parent=137 // pred_check
          %p532 = pneg %p531
        $region152: #{tpu_custom_call.1} parent=137 // pred_check_branch
          %534 = sbr.rel (%p532) target = $region154
        $region153: #{tpu_custom_call.1} parent=137 // pred_region
          %vm535 = vcmask 7168
          %536 = vst.msk [vmem:[%s521] sm:$0xff] %vm535, 0.0
          %537 = vst.msk [vmem:[%s525] sm:$0xff] %vm535, 0.0
          %538 = vst.msk [vmem:[%s529] sm:$0xff] %vm535, 1.0
        $region154: #{tpu_custom_call.1} parent=137 // pred_fallthru
          _
        %v539 = vld [vmem:[%s459] sm:$0xff]
        %v540 = vld [vmem:[%s459 + $0x8] sm:$0xff]
        %v541 = vld [vmem:[%s459 + $0x10] sm:$0xff]
        %v542 = vld [vmem:[%s459 + $0x18] sm:$0xff]
        %v543 = vld [vmem:[%s459 + $0x20] sm:$0xff]
        %v544 = vld [vmem:[%s459 + $0x28] sm:$0xff]
        %v545 = vld [vmem:[%s459 + $0x30] sm:$0xff]
        %v546 = vld [vmem:[%s459 + $0x38] sm:$0xff]
        %v547 = vpack.c.bf16 %v540, %v539
        %v548 = vpack.c.bf16 %v542, %v541
        %v549 = vpack.c.bf16 %v544, %v543
        %v550 = vpack.c.bf16 %v546, %v545
        %v551 = vld [vmem:[%s3] sm:$0xff]
        %v552 = vld [vmem:[%s3 + $0x8] sm:$0xff]
        %v553 = vld [vmem:[%s3 + $0x10] sm:$0xff]
        %v554 = vld [vmem:[%s3 + $0x18] sm:$0xff]
        %v555 = vpack.c.bf16 %v552, %v551
        %v556 = vpack.c.bf16 %v554, %v553
        %vm557 = vcmask 261120
        %v559 = vsel %vm557, %v547, 0
        %v562 = vsel %vm557, %v548, 0
        %v565 = vsel %vm557, %v549, 0
        %v568 = vsel %vm557, %v550, 0
        %570 = vmatprep.subr.bf16.mxu0 0
        %571 = vmatpush1.bf16.msra.mxu0 0
        %572 = vmatprep.subr.bf16.mxu0 0
        %573 = vmatpush1.bf16.msra.mxu0 0
        %574 = vmatprep.subr.bf16.mxu0 0
        %575 = vmatpush1.bf16.msra.mxu0 0
        %576 = vmatprep.subr.bf16.mxu0 0
        %577 = vmatpush1.bf16.msra.mxu0 0
        %578 = vmatprep.subr.bf16.mxu0 0
        %579 = vmatpush1.bf16.msra.mxu0 0
        %580 = vmatprep.subr.bf16.mxu0 0
        %581 = vmatpush1.bf16.msra.mxu0 0
        %582 = vmatprep.subr.bf16.mxu0 0
        %583 = vmatpush1.bf16.msra.mxu0 %v556
        %584 = vmatprep.subr.bf16.mxu0 0
        %585 = vmatpush1.bf16.msra.mxu0 %v555
        %586 = vmatprep.subr.bf16.mxu0 0
        %587 = vmatpush2.bf16.msra.mxu0 0
        %588 = vmatprep.subr.bf16.mxu0 0
        %589 = vmatpush2.bf16.msra.mxu0 0
        %590 = vmatprep.subr.bf16.mxu0 0
        %591 = vmatpush2.bf16.msra.mxu0 0
        %592 = vmatprep.subr.bf16.mxu0 0
        %593 = vmatpush2.bf16.msra.mxu0 0
        %594 = vmatprep.subr.bf16.mxu0 0
        %595 = vmatpush2.bf16.msra.mxu0 0
        %596 = vmatprep.subr.bf16.mxu0 0
        %597 = vmatpush2.bf16.msra.mxu0 0
        %598 = vmatprep.subr.bf16.mxu0 0
        %599 = vmatpush2.bf16.msra.mxu0 0
        %600 = vmatprep.subr.bf16.mxu0 0
        %601 = vmatpush2.bf16.msra.mxu0 0
        %602 = vmatprep.mubr.bf16.mxu0 0
        %603 = vmatmul.mubr.bf16.gmra.mxu0 %v559
        %v604 = vpop.f32.mrf.mxu0
        %v605 = vadd.f32 0.0, %v604
        %v606 = vpop.f32.mrf.mxu0
        %v607 = vpop.f32.mrf.mxu0
        %v608 = vadd.f32 0.0, %v607
        %v609 = vpop.f32.mrf.mxu0
        %610 = vmatprep.mubr.bf16.mxu0 0
        %611 = vmatmul.mubr.bf16.gmra.mxu0 %v562
        %v612 = vpop.f32.mrf.mxu0
        %v613 = vadd.f32 0.0, %v612
        %v614 = vpop.f32.mrf.mxu0
        %v615 = vpop.f32.mrf.mxu0
        %v616 = vadd.f32 0.0, %v615
        %v617 = vpop.f32.mrf.mxu0
        %618 = vmatprep.mubr.bf16.mxu0 0
        %619 = vmatmul.mubr.bf16.gmra.mxu0 %v565
        %v620 = vpop.f32.mrf.mxu0
        %v621 = vadd.f32 0.0, %v620
        %v622 = vpop.f32.mrf.mxu0
        %v623 = vpop.f32.mrf.mxu0
        %v624 = vadd.f32 0.0, %v623
        %v625 = vpop.f32.mrf.mxu0
        %626 = vmatprep.mubr.bf16.mxu0 0
        %627 = vmatmul.mubr.bf16.gmra.mxu0 %v568
        %v628 = vpop.f32.mrf.mxu0
        %v629 = vadd.f32 0.0, %v628
        %v630 = vpop.f32.mrf.mxu0
        %v631 = vpop.f32.mrf.mxu0
        %v632 = vadd.f32 0.0, %v631
        %v633 = vpop.f32.mrf.mxu0
        %634 = vdwg.mxu0
        %v635 = vld [vmem:[%s466] sm:$0xff]
        %v636 = vld [vmem:[%s466 + $0x8] sm:$0xff]
        %v637 = vld [vmem:[%s466 + $0x10] sm:$0xff]
        %v638 = vld [vmem:[%s466 + $0x18] sm:$0xff]
        %v639 = vld [vmem:[%s466 + $0x20] sm:$0xff]
        %v640 = vld [vmem:[%s466 + $0x28] sm:$0xff]
        %v641 = vld [vmem:[%s466 + $0x30] sm:$0xff]
        %v642 = vld [vmem:[%s466 + $0x38] sm:$0xff]
        %v643 = vld [vmem:[%s473] sm:$0xff]
        %v644 = vld [vmem:[%s473 + $0x8] sm:$0xff]
        %v645 = vld [vmem:[%s473 + $0x10] sm:$0xff]
        %v646 = vld [vmem:[%s473 + $0x18] sm:$0xff]
        %v647 = vld [vmem:[%s473 + $0x20] sm:$0xff]
        %v648 = vld [vmem:[%s473 + $0x28] sm:$0xff]
        %v649 = vld [vmem:[%s473 + $0x30] sm:$0xff]
        %v650 = vld [vmem:[%s473 + $0x38] sm:$0xff]
        %651 = vmax.xlane.f32.xlu0 %v605
        %v652 = vpop.xlane.xlu0 %651
        %653 = vmax.xlane.f32.xlu0 %v608
        %v654 = vpop.xlane.xlu0 %653
        %655 = vmax.xlane.f32.xlu0 %v613
        %v656 = vpop.xlane.xlu0 %655
        %657 = vmax.xlane.f32.xlu0 %v616
        %v658 = vpop.xlane.xlu0 %657
        %659 = vmax.xlane.f32.xlu0 %v621
        %v660 = vpop.xlane.xlu0 %659
        %661 = vmax.xlane.f32.xlu0 %v624
        %v662 = vpop.xlane.xlu0 %661
        %663 = vmax.xlane.f32.xlu0 %v629
        %v664 = vpop.xlane.xlu0 %663
        %665 = vmax.xlane.f32.xlu0 %v632
        %v666 = vpop.xlane.xlu0 %665
        %v667 = vsub.f32 %v605, %v652
        %v668 = vsub.f32 %v608, %v654
        %v669 = vsub.f32 %v613, %v656
        %v670 = vsub.f32 %v616, %v658
        %v671 = vsub.f32 %v621, %v660
        %v672 = vsub.f32 %v624, %v662
        %v673 = vsub.f32 %v629, %v664
        %v674 = vsub.f32 %v632, %v666
        %v675 = vmul.f32 %v667, 1.442695
        %v676 = vpow.pop %v675
        %v677 = vmul.f32 %v668, 1.442695
        %v678 = vpow.pop %v677
        %v679 = vmul.f32 %v669, 1.442695
        %v680 = vpow.pop %v679
        %v681 = vmul.f32 %v670, 1.442695
        %v682 = vpow.pop %v681
        %v683 = vmul.f32 %v671, 1.442695
        %v684 = vpow.pop %v683
        %v685 = vmul.f32 %v672, 1.442695
        %v686 = vpow.pop %v685
        %v687 = vmul.f32 %v673, 1.442695
        %v688 = vpow.pop %v687
        %v689 = vmul.f32 %v674, 1.442695
        %v690 = vpow.pop %v689
        %691 = vadd.xlane.f32.xlu0 %v676
        %v692 = vpop.xlane.xlu0 %691
        %693 = vadd.xlane.f32.xlu0 %v678
        %v694 = vpop.xlane.xlu0 %693
        %695 = vadd.xlane.f32.xlu0 %v680
        %v696 = vpop.xlane.xlu0 %695
        %697 = vadd.xlane.f32.xlu0 %v682
        %v698 = vpop.xlane.xlu0 %697
        %699 = vadd.xlane.f32.xlu0 %v684
        %v700 = vpop.xlane.xlu0 %699
        %701 = vadd.xlane.f32.xlu0 %v686
        %v702 = vpop.xlane.xlu0 %701
        %703 = vadd.xlane.f32.xlu0 %v688
        %v704 = vpop.xlane.xlu0 %703
        %705 = vadd.xlane.f32.xlu0 %v690
        %v706 = vpop.xlane.xlu0 %705
        %v707 = vlog2.pop %v692
        %v708 = vmul.f32 %v707, 0.6931472
        %v709 = vlog2.pop %v694
        %v710 = vmul.f32 %v709, 0.6931472
        %v711 = vlog2.pop %v696
        %v712 = vmul.f32 %v711, 0.6931472
        %v713 = vlog2.pop %v698
        %v714 = vmul.f32 %v713, 0.6931472
        %v715 = vlog2.pop %v700
        %v716 = vmul.f32 %v715, 0.6931472
        %v717 = vlog2.pop %v702
        %v718 = vmul.f32 %v717, 0.6931472
        %v719 = vlog2.pop %v704
        %v720 = vmul.f32 %v719, 0.6931472
        %v721 = vlog2.pop %v706
        %v722 = vmul.f32 %v721, 0.6931472
        %v723 = vadd.f32 %v652, %v708
        %v724 = vadd.f32 %v654, %v710
        %v725 = vadd.f32 %v656, %v712
        %v726 = vadd.f32 %v658, %v714
        %v727 = vadd.f32 %v660, %v716
        %v728 = vadd.f32 %v662, %v718
        %v729 = vadd.f32 %v664, %v720
        %v730 = vadd.f32 %v666, %v722
        %v731 = vlaneseq
        %v732 = vand.u32 %v731, 127
        %733 = vset.pattern.permute.xlu0 0
        %734 = vperm.xlu0 %733, %v635
        %v735 = vpop.permute.xlu0 %734
        %736 = vset.pattern.permute.xlu0 0
        %737 = vperm.xlu0 %736, %v636
        %v738 = vpop.permute.xlu0 %737
        %739 = vset.pattern.permute.xlu0 0
        %740 = vperm.xlu0 %739, %v637
        %v741 = vpop.permute.xlu0 %740
        %742 = vset.pattern.permute.xlu0 0
        %743 = vperm.xlu0 %742, %v638
        %v744 = vpop.permute.xlu0 %743
        %745 = vset.pattern.permute.xlu0 0
        %746 = vperm.xlu0 %745, %v639
        %v747 = vpop.permute.xlu0 %746
        %748 = vset.pattern.permute.xlu0 0
        %749 = vperm.xlu0 %748, %v640
        %v750 = vpop.permute.xlu0 %749
        %751 = vset.pattern.permute.xlu0 0
        %752 = vperm.xlu0 %751, %v641
        %v753 = vpop.permute.xlu0 %752
        %754 = vset.pattern.permute.xlu0 0
        %755 = vperm.xlu0 %754, %v642
        %v756 = vpop.permute.xlu0 %755
        %vm757 = vcmp.eq.s32.totalorder %v732, %v735
        %vm758 = vcmp.eq.s32.totalorder %v732, %v738
        %vm759 = vcmp.eq.s32.totalorder %v732, %v741
        %vm760 = vcmp.eq.s32.totalorder %v732, %v744
        %vm761 = vcmp.eq.s32.totalorder %v732, %v747
        %vm762 = vcmp.eq.s32.totalorder %v732, %v750
        %vm763 = vcmp.eq.s32.totalorder %v732, %v753
        %vm764 = vcmp.eq.s32.totalorder %v732, %v756
        %v765 = vsel %vm757, %v605, 0.0
        %v766 = vsel %vm758, %v608, 0.0
        %v767 = vsel %vm759, %v613, 0.0
        %v768 = vsel %vm760, %v616, 0.0
        %v769 = vsel %vm761, %v621, 0.0
        %v770 = vsel %vm762, %v624, 0.0
        %v771 = vsel %vm763, %v629, 0.0
        %v772 = vsel %vm764, %v632, 0.0
        %773 = vadd.xlane.f32.xlu0 %v765
        %v774 = vpop.xlane.xlu0 %773
        %775 = vadd.xlane.f32.xlu0 %v766
        %v776 = vpop.xlane.xlu0 %775
        %777 = vadd.xlane.f32.xlu0 %v767
        %v778 = vpop.xlane.xlu0 %777
        %779 = vadd.xlane.f32.xlu0 %v768
        %v780 = vpop.xlane.xlu0 %779
        %781 = vadd.xlane.f32.xlu0 %v769
        %v782 = vpop.xlane.xlu0 %781
        %783 = vadd.xlane.f32.xlu0 %v770
        %v784 = vpop.xlane.xlu0 %783
        %785 = vadd.xlane.f32.xlu0 %v771
        %v786 = vpop.xlane.xlu0 %785
        %787 = vadd.xlane.f32.xlu0 %v772
        %v788 = vpop.xlane.xlu0 %787
        %vm789 = vcmp.ne.s32.totalorder %v635, 0
        %vm790 = vcmp.ne.s32.totalorder %v636, 0
        %vm791 = vcmp.ne.s32.totalorder %v637, 0
        %vm792 = vcmp.ne.s32.totalorder %v638, 0
        %vm793 = vcmp.ne.s32.totalorder %v639, 0
        %vm794 = vcmp.ne.s32.totalorder %v640, 0
        %vm795 = vcmp.ne.s32.totalorder %v641, 0
        %vm796 = vcmp.ne.s32.totalorder %v642, 0
        %v797 = vsel %vm789, 1, 0
        %v798 = vsel %vm790, 1, 0
        %v799 = vsel %vm791, 1, 0
        %v800 = vsel %vm792, 1, 0
        %v801 = vsel %vm793, 1, 0
        %v802 = vsel %vm794, 1, 0
        %v803 = vsel %vm795, 1, 0
        %v804 = vsel %vm796, 1, 0
        %v805 = vcvt.s32.f32 %v797
        %v806 = vcvt.s32.f32 %v798
        %v807 = vcvt.s32.f32 %v799
        %v808 = vcvt.s32.f32 %v800
        %v809 = vcvt.s32.f32 %v801
        %v810 = vcvt.s32.f32 %v802
        %v811 = vcvt.s32.f32 %v803
        %v812 = vcvt.s32.f32 %v804
        %v813 = vsub.f32 %v723, %v774
        %v814 = vsub.f32 %v724, %v776
        %v815 = vsub.f32 %v725, %v778
        %v816 = vsub.f32 %v726, %v780
        %v817 = vsub.f32 %v727, %v782
        %v818 = vsub.f32 %v728, %v784
        %v819 = vsub.f32 %v729, %v786
        %v820 = vsub.f32 %v730, %v788
        %v821 = vmul.f32 %v813, %v805
        %v822 = vmul.f32 %v814, %v806
        %v823 = vmul.f32 %v815, %v807
        %v824 = vmul.f32 %v816, %v808
        %v825 = vmul.f32 %v817, %v809
        %v826 = vmul.f32 %v818, %v810
        %v827 = vmul.f32 %v819, %v811
        %v828 = vmul.f32 %v820, %v812
        %vm829 = vcmp.ge.f32.partialorder %v774, %v652
        %vm830 = vcmp.ge.f32.partialorder %v776, %v654
        %vm831 = vcmp.ge.f32.partialorder %v778, %v656
        %vm832 = vcmp.ge.f32.partialorder %v780, %v658
        %vm833 = vcmp.ge.f32.partialorder %v782, %v660
        %vm834 = vcmp.ge.f32.partialorder %v784, %v662
        %vm835 = vcmp.ge.f32.partialorder %v786, %v664
        %vm836 = vcmp.ge.f32.partialorder %v788, %v666
        %v837 = vsel %vm829, 1, 0
        %v838 = vsel %vm830, 1, 0
        %v839 = vsel %vm831, 1, 0
        %v840 = vsel %vm832, 1, 0
        %v841 = vsel %vm833, 1, 0
        %v842 = vsel %vm834, 1, 0
        %v843 = vsel %vm835, 1, 0
        %v844 = vsel %vm836, 1, 0
        %v845 = vcvt.s32.f32 %v837
        %v846 = vcvt.s32.f32 %v838
        %v847 = vcvt.s32.f32 %v839
        %v848 = vcvt.s32.f32 %v840
        %v849 = vcvt.s32.f32 %v841
        %v850 = vcvt.s32.f32 %v842
        %v851 = vcvt.s32.f32 %v843
        %v852 = vcvt.s32.f32 %v844
        %v853 = vld [vmem:[%s521] sm:$0xff]
        %v854 = vmul.f32 %v821, %v643
        %v855 = vmul.f32 %v822, %v644
        %v856 = vmul.f32 %v823, %v645
        %v857 = vmul.f32 %v824, %v646
        %v858 = vmul.f32 %v825, %v647
        %v859 = vmul.f32 %v826, %v648
        %v860 = vmul.f32 %v827, %v649
        %v861 = vmul.f32 %v828, %v650
        %vm862 = vcmask 7168
        %v863 = vsel %vm862, %v854, 0.0
        %v864 = vsel %vm862, %v855, 0.0
        %v865 = vadd.f32 %v863, %v864
        %v866 = vsel %vm862, %v856, 0.0
        %v867 = vadd.f32 %v865, %v866
        %v868 = vsel %vm862, %v857, 0.0
        %v869 = vadd.f32 %v867, %v868
        %v870 = vsel %vm862, %v858, 0.0
        %v871 = vadd.f32 %v869, %v870
        %v872 = vsel %vm862, %v859, 0.0
        %v873 = vadd.f32 %v871, %v872
        %v874 = vsel %vm862, %v860, 0.0
        %v875 = vadd.f32 %v873, %v874
        %v876 = vsel %vm862, %v861, 0.0
        %v877 = vadd.f32 %v875, %v876
        %v878 = vadd.f32 %v853, %v877
        %879 = vst.msk [vmem:[%s521] sm:$0xff] %vm862, %v878
        %v880 = vld [vmem:[%s525] sm:$0xff]
        %v881 = vadd.f32 %v845, %v846
        %v882 = vadd.f32 %v881, %v847
        %v883 = vadd.f32 %v882, %v848
        %v884 = vadd.f32 %v883, %v849
        %v885 = vadd.f32 %v884, %v850
        %v886 = vadd.f32 %v885, %v851
        %v887 = vadd.f32 %v886, %v852
        %v888 = vadd.f32 %v880, %v887
        %889 = vst.msk [vmem:[%s525] sm:$0xff] %vm862, %v888
        %vm890 = vcmp.gt.f32.partialorder %v845, 0.0
        %vm891 = vcmp.gt.f32.partialorder %v846, 0.0
        %vm892 = vcmp.gt.f32.partialorder %v847, 0.0
        %vm893 = vcmp.gt.f32.partialorder %v848, 0.0
        %vm894 = vcmp.gt.f32.partialorder %v849, 0.0
        %vm895 = vcmp.gt.f32.partialorder %v850, 0.0
        %vm896 = vcmp.gt.f32.partialorder %v851, 0.0
        %vm897 = vcmp.gt.f32.partialorder %v852, 0.0
        %vm898 = vcmp.le.f32.partialorder %v643, 0.0
        %vm899 = vcmp.le.f32.partialorder %v644, 0.0
        %vm900 = vcmp.le.f32.partialorder %v645, 0.0
        %vm901 = vcmp.le.f32.partialorder %v646, 0.0
        %vm902 = vcmp.le.f32.partialorder %v647, 0.0
        %vm903 = vcmp.le.f32.partialorder %v648, 0.0
        %vm904 = vcmp.le.f32.partialorder %v649, 0.0
        %vm905 = vcmp.le.f32.partialorder %v650, 0.0
        %vm906 = vmor %vm890, %vm898
        %vm907 = vmor %vm891, %vm899
        %vm908 = vmor %vm892, %vm900
        %vm909 = vmor %vm893, %vm901
        %vm910 = vmor %vm894, %vm902
        %vm911 = vmor %vm895, %vm903
        %vm912 = vmor %vm896, %vm904
        %vm913 = vmor %vm897, %vm905
        %v914 = vsel %vm906, 1.0, 0.0
        %v915 = vsel %vm907, 1.0, 0.0
        %v916 = vsel %vm908, 1.0, 0.0
        %v917 = vsel %vm909, 1.0, 0.0
        %v918 = vsel %vm910, 1.0, 0.0
        %v919 = vsel %vm911, 1.0, 0.0
        %v920 = vsel %vm912, 1.0, 0.0
        %v921 = vsel %vm913, 1.0, 0.0
        %v922 = vld [vmem:[%s529] sm:$0xff]
        %v923 = vsel %vm862, %v914, inf
        %v924 = vsel %vm862, %v915, inf
        %v925 = vsel %vm862, %v916, inf
        %v926 = vsel %vm862, %v917, inf
        %v927 = vsel %vm862, %v918, inf
        %v928 = vmin.f32 %v923, %v927
        %v929 = vsel %vm862, %v919, inf
        %v930 = vmin.f32 %v924, %v929
        %v931 = vsel %vm862, %v920, inf
        %v932 = vmin.f32 %v925, %v931
        %v933 = vsel %vm862, %v921, inf
        %v934 = vmin.f32 %v926, %v933
        %v935 = vmin.f32 %v928, %v930
        %v936 = vmin.f32 %v932, %v934
        %v937 = vmin.f32 %v935, %v936
        %v938 = vmin.f32 %v922, %v937
        %939 = vst.msk [vmem:[%s529] sm:$0xff] %vm862, %v938
        %p940 = scmp.lt.s32.totalorder %s22, 1
        %s941 = scalar_select %p940, %s22, 1
        %s942 = smul.addr %s941, 8
        %s943 = scalar_lea.vmem %s4, %s942
        %p944 = scmp.lt.s32.totalorder %s22, 1
        %s945 = scalar_select %p944, %s22, 1
        %s946 = smul.addr %s945, 8
        %s947 = scalar_lea.vmem %s5, %s946
        %p948 = scmp.lt.s32.totalorder %s22, 1
        %s949 = scalar_select %p948, %s22, 1
        %s950 = smul.addr %s949, 8
        %s951 = scalar_lea.vmem %s6, %s950
        // Predicated region
        $region155: #{tpu_custom_call.1} parent=137 // pred_check
          %p952 = pneg %p153
        $region156: #{tpu_custom_call.1} parent=137 // pred_check_branch
          %954 = sbr.rel (%p952) target = $region158
        $region157: #{tpu_custom_call.1} parent=137 // pred_region
          _
        $region158: #{tpu_custom_call.1} parent=137 // pred_fallthru
          _
        // Predicated region
        $region159: #{tpu_custom_call.1} parent=137 // pred_check
          %p955 = pneg %p179
        $region160: #{tpu_custom_call.1} parent=137 // pred_check_branch
          %957 = sbr.rel (%p955) target = $region162
        $region161: #{tpu_custom_call.1} parent=137 // pred_region
          _
        $region162: #{tpu_custom_call.1} parent=137 // pred_fallthru
          _
        // Predicated region
        $region163: #{tpu_custom_call.1} parent=137 // pred_check
          %p958 = pneg %p205
        $region164: #{tpu_custom_call.1} parent=137 // pred_check_branch
          %960 = sbr.rel (%p958) target = $region166
        $region165: #{tpu_custom_call.1} parent=137 // pred_region
          _
        $region166: #{tpu_custom_call.1} parent=137 // pred_fallthru
          _
      $region138: #{tpu_custom_call.1} parent=5 // pred_fallthru
        _
      %p961 = scmp.le.s32.totalorder 2, %s13
      // Predicated region
      $region167: #{tpu_custom_call.1} parent=5 // pred_check
        %p962 = pneg %p961
      $region168: #{tpu_custom_call.1} parent=5 // pred_check_branch
        %964 = sbr.rel (%p962) target = $region170
      $region169: #{tpu_custom_call.1} parent=5 // pred_region
        %s965 = ssub.s32 %s13, 2
        // Predicated region
        $region171: #{tpu_custom_call.1} parent=169 // pred_check
          %p966 = pneg %p159
        $region172: #{tpu_custom_call.1} parent=169 // pred_check_branch
          %968 = sbr.rel (%p966) target = $region174
        $region173: #{tpu_custom_call.1} parent=169 // pred_region
          %p969 = scmp.lt.s32.totalorder %s24, 1
          %s970 = scalar_select %p969, %s24, 1
          %s971 = smul.addr %s970, 8
          %s972 = scalar_lea.vmem %s4, %s971
        $region174: #{tpu_custom_call.1} parent=169 // pred_fallthru
          _
        // Predicated region
        $region175: #{tpu_custom_call.1} parent=169 // pred_check
          %p973 = pneg %p185
        $region176: #{tpu_custom_call.1} parent=169 // pred_check_branch
          %975 = sbr.rel (%p973) target = $region178
        $region177: #{tpu_custom_call.1} parent=169 // pred_region
          %p976 = scmp.lt.s32.totalorder %s24, 1
          %s977 = scalar_select %p976, %s24, 1
          %s978 = smul.addr %s977, 8
          %s979 = scalar_lea.vmem %s5, %s978
        $region178: #{tpu_custom_call.1} parent=169 // pred_fallthru
          _
        // Predicated region
        $region179: #{tpu_custom_call.1} parent=169 // pred_check
          %p980 = pneg %p211
        $region180: #{tpu_custom_call.1} parent=169 // pred_check_branch
          %982 = sbr.rel (%p980) target = $region182
        $region181: #{tpu_custom_call.1} parent=169 // pred_region
          %p983 = scmp.lt.s32.totalorder %s24, 1
          %s984 = scalar_select %p983, %s24, 1
          %s985 = smul.addr %s984, 8
          %s986 = scalar_lea.vmem %s6, %s985
        $region182: #{tpu_custom_call.1} parent=169 // pred_fallthru
          _
      $region170: #{tpu_custom_call.1} parent=5 // pred_fallthru
        _
    $region6: #{tpu_custom_call.1} parent=1 // loop_footer
      %s17 = sadd.s32 1, %s13
    $region7: #{tpu_custom_call.1} parent=1 // loop_footer_branch
      %12 = sbr.rel target = $region3
    $region8: #{tpu_custom_call.1} parent=1 // loop_exit
      _

// kernel: tpu_custom_call.1
$region0: #{tpu_custom_call.1}
  #allocation0 [shape = 'u32[]', space=smem, size = 0x4, offset = 0x4, fixed_abs, tag = 'smem constant byte address 0x4 - core index']
  #allocation1 [shape = 'u32[144,128]{1,0:T(1,128)}', space=vmem, size = 0x12000, scoped, tag = 'internal scratch']
  %s0 = inlined_call_operand.vmem [shape: f32[8,16,32], index: 0, kind: input, shape index: {}]
  %s1 = inlined_call_operand.vmem [shape: s32[8,16,1], index: 1, kind: input, shape index: {}]
  %s2 = inlined_call_operand.vmem [shape: f32[8,16,1], index: 2, kind: input, shape index: {}]
  %s3 = inlined_call_operand.vmem [shape: f32[32,128], index: 3, kind: input, shape index: {}]
  %s4 = inlined_call_operand.vmem [shape: f32[1,16,1], index: 4, kind: output, shape index: {0}]
  %s5 = inlined_call_operand.vmem [shape: f32[1,16,1], index: 5, kind: output, shape index: {1}]
  %s6 = inlined_call_operand.vmem [shape: f32[1,16,1], index: 6, kind: output, shape index: {2}]
  %7 = xla_tuple %s4, %s5, %s6
  %s8 = sld [smem:[#allocation0]]
  $region183: #{tpu_custom_call.1} parent=0
    _
  %s10 = ssub.s32 1, %s8
  %s11 = scalar_select 0, %s10, %s8
  $region1: #{tpu_custom_call.1} parent=0
    #allocation2 [shape = 'u8[65536]{0}', space=vmem, size = 0x10000, scoped, tag = 'input window, operand 0']
    #allocation3 [shape = 'u8[65536]{0}', space=vmem, size = 0x10000, scoped, tag = 'input window, operand 1']
    #allocation4 [shape = 'u8[65536]{0}', space=vmem, size = 0x10000, scoped, tag = 'input window, operand 2']
    loop: start=0, step=1, limit=4
    $region2: #{tpu_custom_call.1} parent=1 // loop_pre_header
      _
    $region3: #{tpu_custom_call.1} parent=1 // loop_header
      %s13 = sphi 0, %s17
      %p14 = scmp.ge.s32.totalorder %s13, 4
      %s20 = sphi 0, %s32
      %s21 = sphi 0, %s28
      %s22 = sphi 0, %s20
      %s23 = sphi 0, %s21
      %s24 = sphi 0, %s22
      %s25 = sphi 0, %s23
      %s37 = sphi 0, %s39
      %s40 = sphi 0, %s37
      %s41 = sphi 0, %s40
      %s57 = sphi 0, %s41
      %s65 = sphi 0, %s67
      %s68 = sphi 0, %s65
      %s69 = sphi 0, %s68
      %s85 = sphi 0, %s69
      %s93 = sphi 0, %s95
      %s96 = sphi 0, %s93
      %s97 = sphi 0, %s96
      %s113 = sphi 0, %s97
      %s117 = sphi 0, %s117
      %s119 = sphi 0, %s117
      %s120 = sphi 0, %s119
      %s134 = sphi 0, %s120
      %s140 = sphi 0, %s142
      %s143 = sphi 0, %s140
      %s144 = sphi 0, %s143
      %s160 = sphi 0, %s144
      %s166 = sphi 0, %s168
      %s169 = sphi 0, %s166
      %s170 = sphi 0, %s169
      %s186 = sphi 0, %s170
      %s192 = sphi 0, %s194
      %s195 = sphi 0, %s192
      %s196 = sphi 0, %s195
      %s212 = sphi 0, %s196
    $region4: #{tpu_custom_call.1} parent=1 // loop_header_branch
      %16 = sbr.rel (%p14) target = $region8
    $region5: #{tpu_custom_call.1} parent=1 // loop_body
      %s18 = ssub.s32 %s13, 1
      %s19 = ssub.s32 %s13, 2
      %s26 = sadd.s32 1, %s21
      %p27 = scmp.ge.s32.totalorder %s26, 1
      %s28 = scalar_select %p27, 0, %s26
      %s29 = sadd.s32 1, %s20
      %s30 = scalar_select %p27, %s29, %s20
      %p31 = scmp.ge.s32.totalorder %s30, 2
      %s32 = scalar_select %p31, 0, %s30
      %s33 = ssub.s32 %s21, %s28
      %s34 = ssub.s32 %s20, %s32
      %s35 = sor.u32 %s33, %s34
      %p36 = scmp.eq.s32.totalorder %s35, 0
      %s38 = sadd.s32 %s37, 1
      %s39 = scalar_select %p36, %s37, %s38
      %p42 = pneg %p36
      %p43 = scmp.eq.s32.totalorder %s13, 1
      %p44 = por %p42, %p43
      %p45 = scmp.ne.s32.totalorder %s37, %s40
      %p46 = scmp.eq.s32.totalorder %s13, 0
      %p47 = por %p45, %p46
      %p48 = scmp.ne.s32.totalorder %s37, %s40
      %p49 = scmp.eq.s32.totalorder %s18, 1
      %p50 = por %p48, %p49
      %p51 = scmp.ne.s32.totalorder %s40, %s41
      %p52 = scmp.eq.s32.totalorder %s18, 0
      %p53 = por %p51, %p52
      %p54 = scmp.ne.s32.totalorder %s40, %s41
      %p55 = scmp.eq.s32.totalorder %s19, 1
      %p56 = por %p54, %p55
      %p58 = scmp.ne.s32.totalorder %s41, %s57
      %p59 = scmp.eq.s32.totalorder %s19, 0
      %p60 = por %p58, %p59
      %s61 = ssub.s32 %s21, %s28
      %s62 = ssub.s32 %s20, %s32
      %s63 = sor.u32 %s61, %s62
      %p64 = scmp.eq.s32.totalorder %s63, 0
      %s66 = sadd.s32 %s65, 1
      %s67 = scalar_select %p64, %s65, %s66
      %p70 = pneg %p64
      %p71 = scmp.eq.s32.totalorder %s13, 1
      %p72 = por %p70, %p71
      %p73 = scmp.ne.s32.totalorder %s65, %s68
      %p74 = scmp.eq.s32.totalorder %s13, 0
      %p75 = por %p73, %p74
      %p76 = scmp.ne.s32.totalorder %s65, %s68
      %p77 = scmp.eq.s32.totalorder %s18, 1
      %p78 = por %p76, %p77
      %p79 = scmp.ne.s32.totalorder %s68, %s69
      %p80 = scmp.eq.s32.totalorder %s18, 0
      %p81 = por %p79, %p80
      %p82 = scmp.ne.s32.totalorder %s68, %s69
      %p83 = scmp.eq.s32.totalorder %s19, 1
      %p84 = por %p82, %p83
      %p86 = scmp.ne.s32.totalorder %s69, %s85
      %p87 = scmp.eq.s32.totalorder %s19, 0
      %p88 = por %p86, %p87
      %s89 = ssub.s32 %s21, %s28
      %s90 = ssub.s32 %s20, %s32
      %s91 = sor.u32 %s89, %s90
      %p92 = scmp.eq.s32.totalorder %s91, 0
      %s94 = sadd.s32 %s93, 1
      %s95 = scalar_select %p92, %s93, %s94
      %p98 = pneg %p92
      %p99 = scmp.eq.s32.totalorder %s13, 1
      %p100 = por %p98, %p99
      %p101 = scmp.ne.s32.totalorder %s93, %s96
      %p102 = scmp.eq.s32.totalorder %s13, 0
      %p103 = por %p101, %p102
      %p104 = scmp.ne.s32.totalorder %s93, %s96
      %p105 = scmp.eq.s32.totalorder %s18, 1
      %p106 = por %p104, %p105
      %p107 = scmp.ne.s32.totalorder %s96, %s97
      %p108 = scmp.eq.s32.totalorder %s18, 0
      %p109 = por %p107, %p108
      %p110 = scmp.ne.s32.totalorder %s96, %s97
      %p111 = scmp.eq.s32.totalorder %s19, 1
      %p112 = por %p110, %p111
      %p114 = scmp.ne.s32.totalorder %s97, %s113
      %p115 = scmp.eq.s32.totalorder %s19, 0
      %p116 = por %p114, %p115
      %s118 = sadd.s32 %s117, 1
      %p121 = scmp.eq.s32.totalorder %s13, 1
      %p122 = scmp.ne.s32.totalorder %s117, %s119
      %p123 = scmp.eq.s32.totalorder %s13, 0
      %p124 = por %p122, %p123
      %p125 = scmp.ne.s32.totalorder %s117, %s119
      %p126 = scmp.eq.s32.totalorder %s18, 1
      %p127 = por %p125, %p126
      %p128 = scmp.ne.s32.totalorder %s119, %s120
      %p129 = scmp.eq.s32.totalorder %s18, 0
      %p130 = por %p128, %p129
      %p131 = scmp.ne.s32.totalorder %s119, %s120
      %p132 = scmp.eq.s32.totalorder %s19, 1
      %p133 = por %p131, %p132
      %p135 = scmp.ne.s32.totalorder %s120, %s134
      %p136 = scmp.eq.s32.totalorder %s19, 0
      %p137 = por %p135, %p136
      %s138 = ssub.s32 %s20, %s32
      %p139 = scmp.eq.s32.totalorder %s138, 0
      %s141 = sadd.s32 %s140, 1
      %s142 = scalar_select %p139, %s140, %s141
      %p145 = pneg %p139
      %p146 = scmp.eq.s32.totalorder %s13, 1
      %p147 = por %p145, %p146
      %p148 = scmp.ne.s32.totalorder %s140, %s143
      %p149 = scmp.eq.s32.totalorder %s13, 0
      %p150 = por %p148, %p149
      %p151 = scmp.ne.s32.totalorder %s140, %s143
      %p152 = scmp.eq.s32.totalorder %s18, 1
      %p153 = por %p151, %p152
      %p154 = scmp.ne.s32.totalorder %s143, %s144
      %p155 = scmp.eq.s32.totalorder %s18, 0
      %p156 = por %p154, %p155
      %p157 = scmp.ne.s32.totalorder %s143, %s144
      %p158 = scmp.eq.s32.totalorder %s19, 1
      %p159 = por %p157, %p158
      %p161 = scmp.ne.s32.totalorder %s144, %s160
      %p162 = scmp.eq.s32.totalorder %s19, 0
      %p163 = por %p161, %p162
      %s164 = ssub.s32 %s20, %s32
      %p165 = scmp.eq.s32.totalorder %s164, 0
      %s167 = sadd.s32 %s166, 1
      %s168 = scalar_select %p165, %s166, %s167
      %p171 = pneg %p165
      %p172 = scmp.eq.s32.totalorder %s13, 1
      %p173 = por %p171, %p172
      %p174 = scmp.ne.s32.totalorder %s166, %s169
      %p175 = scmp.eq.s32.totalorder %s13, 0
      %p176 = por %p174, %p175
      %p177 = scmp.ne.s32.totalorder %s166, %s169
      %p178 = scmp.eq.s32.totalorder %s18, 1
      %p179 = por %p177, %p178
      %p180 = scmp.ne.s32.totalorder %s169, %s170
      %p181 = scmp.eq.s32.totalorder %s18, 0
      %p182 = por %p180, %p181
      %p183 = scmp.ne.s32.totalorder %s169, %s170
      %p184 = scmp.eq.s32.totalorder %s19, 1
      %p185 = por %p183, %p184
      %p187 = scmp.ne.s32.totalorder %s170, %s186
      %p188 = scmp.eq.s32.totalorder %s19, 0
      %p189 = por %p187, %p188
      %s190 = ssub.s32 %s20, %s32
      %p191 = scmp.eq.s32.totalorder %s190, 0
      %s193 = sadd.s32 %s192, 1
      %s194 = scalar_select %p191, %s192, %s193
      %p197 = pneg %p191
      %p198 = scmp.eq.s32.totalorder %s13, 1
      %p199 = por %p197, %p198
      %p200 = scmp.ne.s32.totalorder %s192, %s195
      %p201 = scmp.eq.s32.totalorder %s13, 0
      %p202 = por %p200, %p201
      %p203 = scmp.ne.s32.totalorder %s192, %s195
      %p204 = scmp.eq.s32.totalorder %s18, 1
      %p205 = por %p203, %p204
      %p206 = scmp.ne.s32.totalorder %s195, %s196
      %p207 = scmp.eq.s32.totalorder %s18, 0
      %p208 = por %p206, %p207
      %p209 = scmp.ne.s32.totalorder %s195, %s196
      %p210 = scmp.eq.s32.totalorder %s19, 1
      %p211 = por %p209, %p210
      %p213 = scmp.ne.s32.totalorder %s196, %s212
      %p214 = scmp.eq.s32.totalorder %s19, 0
      %p215 = por %p213, %p214
      %p216 = scmp.le.s32.totalorder 1, %s13
      %p217 = scmp.lt.s32.totalorder %s13, 3
      %p218 = pnand %p216, %p217
      %p219 = pneg %p218
      // Predicated region
      $region9: #{tpu_custom_call.1} parent=5 // pred_check
        _
      $region10: #{tpu_custom_call.1} parent=5 // pred_check_branch
        %221 = sbr.rel (%p218) target = $region12
      $region11: #{tpu_custom_call.1} parent=5 // pred_region
        %s222 = ssub.s32 %s13, 1
        // Predicated region
        $region13: #{tpu_custom_call.1} parent=11 // pred_check
          %p223 = pneg %p130
        $region14: #{tpu_custom_call.1} parent=11 // pred_check_branch
          %225 = sbr.rel (%p223) target = $region16
        $region15: #{tpu_custom_call.1} parent=11 // pred_region
          _
        $region16: #{tpu_custom_call.1} parent=11 // pred_fallthru
          _
      $region12: #{tpu_custom_call.1} parent=5 // pred_fallthru
        _
      %p226 = scmp.lt.s32.totalorder %s13, 2
      // Predicated region
      $region17: #{tpu_custom_call.1} parent=5 // pred_check
        %p227 = pneg %p226
      $region18: #{tpu_custom_call.1} parent=5 // pred_check_branch
        %229 = sbr.rel (%p227) target = $region20
      $region19: #{tpu_custom_call.1} parent=5 // pred_region
        // Predicated region
        $region21: #{tpu_custom_call.1} parent=19 // pred_check
          %p230 = pneg %p47
        $region22: #{tpu_custom_call.1} parent=19 // pred_check_branch
          %232 = sbr.rel (%p230) target = $region24
        $region23: #{tpu_custom_call.1} parent=19 // pred_region
          %s233 = sand.u32 %s37, 1
          %s234 = sand.u32 %s37, 1
          %s235 = smul.addr %s234, 64
          %s236 = scalar_lea.vmem [#allocation2], %s235
          %s237 = smul.u32 8, %s21
          %s238 = smul.addr %s237, 2
          %s239 = sadd.s32 %s20, %s238
          %s240 = smul.addr %s239, 8
          %s241 = scalar_lea.vmem %s0, %s240
          // Predicated region
          $region25: #{tpu_custom_call.1} parent=23 // pred_check
            _
          $region26: #{tpu_custom_call.1} parent=23 // pred_check_branch
            %243 = sbr.rel (0) target = $region28
          $region27: #{tpu_custom_call.1} parent=23 // pred_region
            // Predicated region
            $region29: #{tpu_custom_call.1} parent=27 // pred_check
              _
            $region30: #{tpu_custom_call.1} parent=27 // pred_check_branch
              %245 = sbr.rel (0) target = $region32
            $region31: #{tpu_custom_call.1} parent=27 // pred_region
              // Predicated region
              $region44: #{tpu_custom_call.1} parent=31 // pred_check
                _
              $region45: #{tpu_custom_call.1} parent=31 // pred_check_branch
                %275 = sbr.rel (0) target = $region47
              $region46: #{tpu_custom_call.1} parent=31 // pred_region
                loop: start=0, step=1, limit=1
                $region48: #{tpu_custom_call.1} parent=46 // loop_pre_header
                  _
                $region49: #{tpu_custom_call.1} parent=46 // loop_header
                  %s277 = sphi 0, %s281
                  %p278 = scmp.ge.s32.totalorder %s277, 1
                  %s282 = sphi %s241, %s241
                  %s283 = sphi %s236, %s236
                $region50: #{tpu_custom_call.1} parent=46 // loop_header_branch
                  %280 = sbr.rel (%p278) target = $region54
                $region51: #{tpu_custom_call.1} parent=46 // loop_body
                  %v284 = vld [vmem:[%s282] sm:$0xff]
                  %285 = vst [vmem:[%s283] sm:$0xff] %v284
                  %v286 = vld [vmem:[%s282 + $0x10] sm:$0xff]
                  %287 = vst [vmem:[%s283 + $0x8] sm:$0xff] %v286
                  %v288 = vld [vmem:[%s282 + $0x20] sm:$0xff]
                  %289 = vst [vmem:[%s283 + $0x10] sm:$0xff] %v288
                  %v290 = vld [vmem:[%s282 + $0x30] sm:$0xff]
                  %291 = vst [vmem:[%s283 + $0x18] sm:$0xff] %v290
                  %v292 = vld [vmem:[%s282 + $0x40] sm:$0xff]
                  %293 = vst [vmem:[%s283 + $0x20] sm:$0xff] %v292
                  %v294 = vld [vmem:[%s282 + $0x50] sm:$0xff]
                  %295 = vst [vmem:[%s283 + $0x28] sm:$0xff] %v294
                  %v296 = vld [vmem:[%s282 + $0x60] sm:$0xff]
                  %297 = vst [vmem:[%s283 + $0x30] sm:$0xff] %v296
                  %v298 = vld [vmem:[%s282 + $0x70] sm:$0xff]
                  %299 = vst [vmem:[%s283 + $0x38] sm:$0xff] %v298
                $region52: #{tpu_custom_call.1} parent=46 // loop_footer
                  %s281 = sadd.s32 1, %s277
                $region53: #{tpu_custom_call.1} parent=46 // loop_footer_branch
                  %276 = sbr.rel target = $region49
                $region54: #{tpu_custom_call.1} parent=46 // loop_exit
                  _
              $region47: #{tpu_custom_call.1} parent=31 // pred_fallthru
                _
              // Predicated region
              $region55: #{tpu_custom_call.1} parent=31 // pred_check
                _
              $region56: #{tpu_custom_call.1} parent=31 // pred_check_branch
                %301 = sbr.rel target = $region58
              $region57: #{tpu_custom_call.1} parent=31 // pred_region
                _
              $region58: #{tpu_custom_call.1} parent=31 // pred_fallthru
                _
            $region32: #{tpu_custom_call.1} parent=27 // pred_fallthru
              _
            // Predicated region
            $region33: #{tpu_custom_call.1} parent=27 // pred_check
              _
            $region34: #{tpu_custom_call.1} parent=27 // pred_check_branch
              %247 = sbr.rel target = $region36
            $region35: #{tpu_custom_call.1} parent=27 // pred_region
              %s249 = ssub.s32 256, 1
              loop: start=0, step=1, limit=1
              $region37: #{tpu_custom_call.1} parent=35 // loop_pre_header
                _
              $region38: #{tpu_custom_call.1} parent=35 // loop_header
                %s251 = sphi 0, %s255
                %p252 = scmp.ge.s32.totalorder %s251, 1
                %s256 = sphi %s241, %s241
                %s257 = sphi %s236, %s236
              $region39: #{tpu_custom_call.1} parent=35 // loop_header_branch
                %254 = sbr.rel (%p252) target = $region43
              $region40: #{tpu_custom_call.1} parent=35 // loop_body
                %v258 = vld [vmem:[%s256] sm:%s249]
                %259 = vst [vmem:[%s257] sm:%s249] %v258
                %v260 = vld [vmem:[%s256 + $0x10] sm:%s249]
                %261 = vst [vmem:[%s257 + $0x8] sm:%s249] %v260
                %v262 = vld [vmem:[%s256 + $0x20] sm:%s249]
                %263 = vst [vmem:[%s257 + $0x10] sm:%s249] %v262
                %v264 = vld [vmem:[%s256 + $0x30] sm:%s249]
                %265 = vst [vmem:[%s257 + $0x18] sm:%s249] %v264
                %v266 = vld [vmem:[%s256 + $0x40] sm:%s249]
                %267 = vst [vmem:[%s257 + $0x20] sm:%s249] %v266
                %v268 = vld [vmem:[%s256 + $0x50] sm:%s249]
                %269 = vst [vmem:[%s257 + $0x28] sm:%s249] %v268
                %v270 = vld [vmem:[%s256 + $0x60] sm:%s249]
                %271 = vst [vmem:[%s257 + $0x30] sm:%s249] %v270
                %v272 = vld [vmem:[%s256 + $0x70] sm:%s249]
                %273 = vst [vmem:[%s257 + $0x38] sm:%s249] %v272
              $region41: #{tpu_custom_call.1} parent=35 // loop_footer
                %s255 = sadd.s32 1, %s251
              $region42: #{tpu_custom_call.1} parent=35 // loop_footer_branch
                %250 = sbr.rel target = $region38
              $region43: #{tpu_custom_call.1} parent=35 // loop_exit
                _
            $region36: #{tpu_custom_call.1} parent=27 // pred_fallthru
              _
          $region28: #{tpu_custom_call.1} parent=23 // pred_fallthru
            _
          %302 = vnop
        $region24: #{tpu_custom_call.1} parent=19 // pred_fallthru
          _
        // Predicated region
        $region59: #{tpu_custom_call.1} parent=19 // pred_check
          %p303 = pneg %p75
        $region60: #{tpu_custom_call.1} parent=19 // pred_check_branch
          %305 = sbr.rel (%p303) target = $region62
        $region61: #{tpu_custom_call.1} parent=19 // pred_region
          %s306 = sand.u32 %s65, 1
          %s307 = sand.u32 %s65, 1
          %s308 = smul.addr %s307, 64
          %s309 = scalar_lea.vmem [#allocation3], %s308
          %s310 = smul.u32 8, %s21
          %s311 = smul.addr %s310, 2
          %s312 = sadd.s32 %s20, %s311
          %s313 = smul.addr %s312, 8
          %s314 = scalar_lea.vmem %s1, %s313
          // Predicated region
          $region63: #{tpu_custom_call.1} parent=61 // pred_check
            _
          $region64: #{tpu_custom_call.1} parent=61 // pred_check_branch
            %316 = sbr.rel (0) target = $region66
          $region65: #{tpu_custom_call.1} parent=61 // pred_region
            // Predicated region
            $region67: #{tpu_custom_call.1} parent=65 // pred_check
              _
            $region68: #{tpu_custom_call.1} parent=65 // pred_check_branch
              %318 = sbr.rel (0) target = $region70
            $region69: #{tpu_custom_call.1} parent=65 // pred_region
              // Predicated region
              $region82: #{tpu_custom_call.1} parent=69 // pred_check
                _
              $region83: #{tpu_custom_call.1} parent=69 // pred_check_branch
                %348 = sbr.rel (0) target = $region85
              $region84: #{tpu_custom_call.1} parent=69 // pred_region
                loop: start=0, step=1, limit=1
                $region86: #{tpu_custom_call.1} parent=84 // loop_pre_header
                  _
                $region87: #{tpu_custom_call.1} parent=84 // loop_header
                  %s350 = sphi 0, %s354
                  %p351 = scmp.ge.s32.totalorder %s350, 1
                  %s355 = sphi %s314, %s314
                  %s356 = sphi %s309, %s309
                $region88: #{tpu_custom_call.1} parent=84 // loop_header_branch
                  %353 = sbr.rel (%p351) target = $region92
                $region89: #{tpu_custom_call.1} parent=84 // loop_body
                  %v357 = vld [vmem:[%s355] sm:$0xff]
                  %358 = vst [vmem:[%s356] sm:$0xff] %v357
                  %v359 = vld [vmem:[%s355 + $0x10] sm:$0xff]
                  %360 = vst [vmem:[%s356 + $0x8] sm:$0xff] %v359
                  %v361 = vld [vmem:[%s355 + $0x20] sm:$0xff]
                  %362 = vst [vmem:[%s356 + $0x10] sm:$0xff] %v361
                  %v363 = vld [vmem:[%s355 + $0x30] sm:$0xff]
                  %364 = vst [vmem:[%s356 + $0x18] sm:$0xff] %v363
                  %v365 = vld [vmem:[%s355 + $0x40] sm:$0xff]
                  %366 = vst [vmem:[%s356 + $0x20] sm:$0xff] %v365
                  %v367 = vld [vmem:[%s355 + $0x50] sm:$0xff]
                  %368 = vst [vmem:[%s356 + $0x28] sm:$0xff] %v367
                  %v369 = vld [vmem:[%s355 + $0x60] sm:$0xff]
                  %370 = vst [vmem:[%s356 + $0x30] sm:$0xff] %v369
                  %v371 = vld [vmem:[%s355 + $0x70] sm:$0xff]
                  %372 = vst [vmem:[%s356 + $0x38] sm:$0xff] %v371
                $region90: #{tpu_custom_call.1} parent=84 // loop_footer
                  %s354 = sadd.s32 1, %s350
                $region91: #{tpu_custom_call.1} parent=84 // loop_footer_branch
                  %349 = sbr.rel target = $region87
                $region92: #{tpu_custom_call.1} parent=84 // loop_exit
                  _
              $region85: #{tpu_custom_call.1} parent=69 // pred_fallthru
                _
              // Predicated region
              $region93: #{tpu_custom_call.1} parent=69 // pred_check
                _
              $region94: #{tpu_custom_call.1} parent=69 // pred_check_branch
                %374 = sbr.rel target = $region96
              $region95: #{tpu_custom_call.1} parent=69 // pred_region
                _
              $region96: #{tpu_custom_call.1} parent=69 // pred_fallthru
                _
            $region70: #{tpu_custom_call.1} parent=65 // pred_fallthru
              _
            // Predicated region
            $region71: #{tpu_custom_call.1} parent=65 // pred_check
              _
            $region72: #{tpu_custom_call.1} parent=65 // pred_check_branch
              %320 = sbr.rel target = $region74
            $region73: #{tpu_custom_call.1} parent=65 // pred_region
              %s322 = ssub.s32 256, 1
              loop: start=0, step=1, limit=1
              $region75: #{tpu_custom_call.1} parent=73 // loop_pre_header
                _
              $region76: #{tpu_custom_call.1} parent=73 // loop_header
                %s324 = sphi 0, %s328
                %p325 = scmp.ge.s32.totalorder %s324, 1
                %s329 = sphi %s314, %s314
                %s330 = sphi %s309, %s309
              $region77: #{tpu_custom_call.1} parent=73 // loop_header_branch
                %327 = sbr.rel (%p325) target = $region81
              $region78: #{tpu_custom_call.1} parent=73 // loop_body
                %v331 = vld [vmem:[%s329] sm:%s322]
                %332 = vst [vmem:[%s330] sm:%s322] %v331
                %v333 = vld [vmem:[%s329 + $0x10] sm:%s322]
                %334 = vst [vmem:[%s330 + $0x8] sm:%s322] %v333
                %v335 = vld [vmem:[%s329 + $0x20] sm:%s322]
                %336 = vst [vmem:[%s330 + $0x10] sm:%s322] %v335
                %v337 = vld [vmem:[%s329 + $0x30] sm:%s322]
                %338 = vst [vmem:[%s330 + $0x18] sm:%s322] %v337
                %v339 = vld [vmem:[%s329 + $0x40] sm:%s322]
                %340 = vst [vmem:[%s330 + $0x20] sm:%s322] %v339
                %v341 = vld [vmem:[%s329 + $0x50] sm:%s322]
                %342 = vst [vmem:[%s330 + $0x28] sm:%s322] %v341
                %v343 = vld [vmem:[%s329 + $0x60] sm:%s322]
                %344 = vst [vmem:[%s330 + $0x30] sm:%s322] %v343
                %v345 = vld [vmem:[%s329 + $0x70] sm:%s322]
                %346 = vst [vmem:[%s330 + $0x38] sm:%s322] %v345
              $region79: #{tpu_custom_call.1} parent=73 // loop_footer
                %s328 = sadd.s32 1, %s324
              $region80: #{tpu_custom_call.1} parent=73 // loop_footer_branch
                %323 = sbr.rel target = $region76
              $region81: #{tpu_custom_call.1} parent=73 // loop_exit
                _
            $region74: #{tpu_custom_call.1} parent=65 // pred_fallthru
              _
          $region66: #{tpu_custom_call.1} parent=61 // pred_fallthru
            _
          %375 = vnop
        $region62: #{tpu_custom_call.1} parent=19 // pred_fallthru
          _
        // Predicated region
        $region97: #{tpu_custom_call.1} parent=19 // pred_check
          %p376 = pneg %p103
        $region98: #{tpu_custom_call.1} parent=19 // pred_check_branch
          %378 = sbr.rel (%p376) target = $region100
        $region99: #{tpu_custom_call.1} parent=19 // pred_region
          %s379 = sand.u32 %s93, 1
          %s380 = sand.u32 %s93, 1
          %s381 = smul.addr %s380, 64
          %s382 = scalar_lea.vmem [#allocation4], %s381
          %s383 = smul.u32 8, %s21
          %s384 = smul.addr %s383, 2
          %s385 = sadd.s32 %s20, %s384
          %s386 = smul.addr %s385, 8
          %s387 = scalar_lea.vmem %s2, %s386
          // Predicated region
          $region101: #{tpu_custom_call.1} parent=99 // pred_check
            _
          $region102: #{tpu_custom_call.1} parent=99 // pred_check_branch
            %389 = sbr.rel (0) target = $region104
          $region103: #{tpu_custom_call.1} parent=99 // pred_region
            // Predicated region
            $region105: #{tpu_custom_call.1} parent=103 // pred_check
              _
            $region106: #{tpu_custom_call.1} parent=103 // pred_check_branch
              %391 = sbr.rel (0) target = $region108
            $region107: #{tpu_custom_call.1} parent=103 // pred_region
              // Predicated region
              $region120: #{tpu_custom_call.1} parent=107 // pred_check
                _
              $region121: #{tpu_custom_call.1} parent=107 // pred_check_branch
                %421 = sbr.rel (0) target = $region123
              $region122: #{tpu_custom_call.1} parent=107 // pred_region
                loop: start=0, step=1, limit=1
                $region124: #{tpu_custom_call.1} parent=122 // loop_pre_header
                  _
                $region125: #{tpu_custom_call.1} parent=122 // loop_header
                  %s423 = sphi 0, %s427
                  %p424 = scmp.ge.s32.totalorder %s423, 1
                  %s428 = sphi %s387, %s387
                  %s429 = sphi %s382, %s382
                $region126: #{tpu_custom_call.1} parent=122 // loop_header_branch
                  %426 = sbr.rel (%p424) target = $region130
                $region127: #{tpu_custom_call.1} parent=122 // loop_body
                  %v430 = vld [vmem:[%s428] sm:$0xff]
                  %431 = vst [vmem:[%s429] sm:$0xff] %v430
                  %v432 = vld [vmem:[%s428 + $0x10] sm:$0xff]
                  %433 = vst [vmem:[%s429 + $0x8] sm:$0xff] %v432
                  %v434 = vld [vmem:[%s428 + $0x20] sm:$0xff]
                  %435 = vst [vmem:[%s429 + $0x10] sm:$0xff] %v434
                  %v436 = vld [vmem:[%s428 + $0x30] sm:$0xff]
                  %437 = vst [vmem:[%s429 + $0x18] sm:$0xff] %v436
                  %v438 = vld [vmem:[%s428 + $0x40] sm:$0xff]
                  %439 = vst [vmem:[%s429 + $0x20] sm:$0xff] %v438
                  %v440 = vld [vmem:[%s428 + $0x50] sm:$0xff]
                  %441 = vst [vmem:[%s429 + $0x28] sm:$0xff] %v440
                  %v442 = vld [vmem:[%s428 + $0x60] sm:$0xff]
                  %443 = vst [vmem:[%s429 + $0x30] sm:$0xff] %v442
                  %v444 = vld [vmem:[%s428 + $0x70] sm:$0xff]
                  %445 = vst [vmem:[%s429 + $0x38] sm:$0xff] %v444
                $region128: #{tpu_custom_call.1} parent=122 // loop_footer
                  %s427 = sadd.s32 1, %s423
                $region129: #{tpu_custom_call.1} parent=122 // loop_footer_branch
                  %422 = sbr.rel target = $region125
                $region130: #{tpu_custom_call.1} parent=122 // loop_exit
                  _
              $region123: #{tpu_custom_call.1} parent=107 // pred_fallthru
                _
              // Predicated region
              $region131: #{tpu_custom_call.1} parent=107 // pred_check
                _
              $region132: #{tpu_custom_call.1} parent=107 // pred_check_branch
                %447 = sbr.rel target = $region134
              $region133: #{tpu_custom_call.1} parent=107 // pred_region
                _
              $region134: #{tpu_custom_call.1} parent=107 // pred_fallthru
                _
            $region108: #{tpu_custom_call.1} parent=103 // pred_fallthru
              _
            // Predicated region
            $region109: #{tpu_custom_call.1} parent=103 // pred_check
              _
            $region110: #{tpu_custom_call.1} parent=103 // pred_check_branch
              %393 = sbr.rel target = $region112
            $region111: #{tpu_custom_call.1} parent=103 // pred_region
              %s395 = ssub.s32 256, 1
              loop: start=0, step=1, limit=1
              $region113: #{tpu_custom_call.1} parent=111 // loop_pre_header
                _
              $region114: #{tpu_custom_call.1} parent=111 // loop_header
                %s397 = sphi 0, %s401
                %p398 = scmp.ge.s32.totalorder %s397, 1
                %s402 = sphi %s387, %s387
                %s403 = sphi %s382, %s382
              $region115: #{tpu_custom_call.1} parent=111 // loop_header_branch
                %400 = sbr.rel (%p398) target = $region119
              $region116: #{tpu_custom_call.1} parent=111 // loop_body
                %v404 = vld [vmem:[%s402] sm:%s395]
                %405 = vst [vmem:[%s403] sm:%s395] %v404
                %v406 = vld [vmem:[%s402 + $0x10] sm:%s395]
                %407 = vst [vmem:[%s403 + $0x8] sm:%s395] %v406
                %v408 = vld [vmem:[%s402 + $0x20] sm:%s395]
                %409 = vst [vmem:[%s403 + $0x10] sm:%s395] %v408
                %v410 = vld [vmem:[%s402 + $0x30] sm:%s395]
                %411 = vst [vmem:[%s403 + $0x18] sm:%s395] %v410
                %v412 = vld [vmem:[%s402 + $0x40] sm:%s395]
                %413 = vst [vmem:[%s403 + $0x20] sm:%s395] %v412
                %v414 = vld [vmem:[%s402 + $0x50] sm:%s395]
                %415 = vst [vmem:[%s403 + $0x28] sm:%s395] %v414
                %v416 = vld [vmem:[%s402 + $0x60] sm:%s395]
                %417 = vst [vmem:[%s403 + $0x30] sm:%s395] %v416
                %v418 = vld [vmem:[%s402 + $0x70] sm:%s395]
                %419 = vst [vmem:[%s403 + $0x38] sm:%s395] %v418
              $region117: #{tpu_custom_call.1} parent=111 // loop_footer
                %s401 = sadd.s32 1, %s397
              $region118: #{tpu_custom_call.1} parent=111 // loop_footer_branch
                %396 = sbr.rel target = $region114
              $region119: #{tpu_custom_call.1} parent=111 // loop_exit
                _
            $region112: #{tpu_custom_call.1} parent=103 // pred_fallthru
              _
          $region104: #{tpu_custom_call.1} parent=99 // pred_fallthru
            _
          %448 = vnop
        $region100: #{tpu_custom_call.1} parent=19 // pred_fallthru
          _
      $region20: #{tpu_custom_call.1} parent=5 // pred_fallthru
        _
      %p449 = scmp.le.s32.totalorder 1, %s13
      %p450 = scmp.lt.s32.totalorder %s13, 3
      %p451 = pnand %p449, %p450
      %p452 = pneg %p451
      // Predicated region
      $region135: #{tpu_custom_call.1} parent=5 // pred_check
        _
      $region136: #{tpu_custom_call.1} parent=5 // pred_check_branch
        %454 = sbr.rel (%p451) target = $region138
      $region137: #{tpu_custom_call.1} parent=5 // pred_region
        %s455 = ssub.s32 %s13, 1
        %s456 = sand.u32 %s40, 1
        %s457 = sand.u32 %s40, 1
        %s458 = smul.addr %s457, 64
        %s459 = scalar_lea.vmem [#allocation2], %s458
        // Predicated region
        $region139: #{tpu_custom_call.1} parent=137 // pred_check
          %p460 = pneg %p53
        $region140: #{tpu_custom_call.1} parent=137 // pred_check_branch
          %462 = sbr.rel (%p460) target = $region142
        $region141: #{tpu_custom_call.1} parent=137 // pred_region
          _
        $region142: #{tpu_custom_call.1} parent=137 // pred_fallthru
          _
        %s463 = sand.u32 %s68, 1
        %s464 = sand.u32 %s68, 1
        %s465 = smul.addr %s464, 64
        %s466 = scalar_lea.vmem [#allocation3], %s465
        // Predicated region
        $region143: #{tpu_custom_call.1} parent=137 // pred_check
          %p467 = pneg %p81
        $region144: #{tpu_custom_call.1} parent=137 // pred_check_branch
          %469 = sbr.rel (%p467) target = $region146
        $region145: #{tpu_custom_call.1} parent=137 // pred_region
          _
        $region146: #{tpu_custom_call.1} parent=137 // pred_fallthru
          _
        %s470 = sand.u32 %s96, 1
        %s471 = sand.u32 %s96, 1
        %s472 = smul.addr %s471, 64
        %s473 = scalar_lea.vmem [#allocation4], %s472
        // Predicated region
        $region147: #{tpu_custom_call.1} parent=137 // pred_check
          %p474 = pneg %p109
        $region148: #{tpu_custom_call.1} parent=137 // pred_check_branch
          %476 = sbr.rel (%p474) target = $region150
        $region149: #{tpu_custom_call.1} parent=137 // pred_region
          _
        $region150: #{tpu_custom_call.1} parent=137 // pred_fallthru
          _
        %s477 = sand.u32 %s40, 1
        %s478 = sand.u32 %s40, 1
        %s479 = smul.addr %s478, 64
        %s480 = scalar_lea.vmem [#allocation2], %s479
        %p481 = pneg %p53
        %p482 = pneg %p50
        %s483 = sand.u32 %s68, 1
        %s484 = sand.u32 %s68, 1
        %s485 = smul.addr %s484, 64
        %s486 = scalar_lea.vmem [#allocation3], %s485
        %p487 = pneg %p81
        %p488 = pneg %p78
        %s489 = sand.u32 %s96, 1
        %s490 = sand.u32 %s96, 1
        %s491 = smul.addr %s490, 64
        %s492 = scalar_lea.vmem [#allocation4], %s491
        %p493 = pneg %p109
        %p494 = pneg %p106
        %p495 = pneg %p130
        %p496 = pneg %p127
        %p497 = pneg %p156
        %p498 = pneg %p153
        %p499 = scmp.lt.s32.totalorder %s22, 1
        %s500 = scalar_select %p499, %s22, 1
        %s501 = smul.addr %s500, 8
        %s502 = scalar_lea.vmem %s4, %s501
        %p503 = pneg %p182
        %p504 = pneg %p179
        %p505 = scmp.lt.s32.totalorder %s22, 1
        %s506 = scalar_select %p505, %s22, 1
        %s507 = smul.addr %s506, 8
        %s508 = scalar_lea.vmem %s5, %s507
        %p509 = pneg %p208
        %p510 = pneg %p205
        %p511 = scmp.lt.s32.totalorder %s22, 1
        %s512 = scalar_select %p511, %s22, 1
        %s513 = smul.addr %s512, 8
        %s514 = scalar_lea.vmem %s6, %s513
        %s515 = smul.u32 8, %s23
        %s516 = smul.u32 8, %s23
        %s517 = smul.u32 8, %s23
        %p518 = scmp.lt.s32.totalorder %s22, 1
        %s519 = scalar_select %p518, %s22, 1
        %s520 = smul.addr %s519, 8
        %s521 = scalar_lea.vmem %s4, %s520
        %p522 = scmp.lt.s32.totalorder %s22, 1
        %s523 = scalar_select %p522, %s22, 1
        %s524 = smul.addr %s523, 8
        %s525 = scalar_lea.vmem %s5, %s524
        %p526 = scmp.lt.s32.totalorder %s22, 1
        %s527 = scalar_select %p526, %s22, 1
        %s528 = smul.addr %s527, 8
        %s529 = scalar_lea.vmem %s6, %s528
        %p531 = scmp.eq.s32.totalorder %s23, 0
        // Predicated region
        $region151: #{tpu_custom_call.1} parent=137 // pred_check
          %p532 = pneg %p531
        $region152: #{tpu_custom_call.1} parent=137 // pred_check_branch
          %534 = sbr.rel (%p532) target = $region154
        $region153: #{tpu_custom_call.1} parent=137 // pred_region
          %vm535 = vcmask 7168
          %536 = vst.msk [vmem:[%s521] sm:$0xff] %vm535, 0.0
          %537 = vst.msk [vmem:[%s525] sm:$0xff] %vm535, 0.0
          %538 = vst.msk [vmem:[%s529] sm:$0xff] %vm535, 1.0
        $region154: #{tpu_custom_call.1} parent=137 // pred_fallthru
          _
        %v539 = vld [vmem:[%s459] sm:$0xff]
        %v540 = vld [vmem:[%s459 + $0x8] sm:$0xff]
        %v541 = vld [vmem:[%s459 + $0x10] sm:$0xff]
        %v542 = vld [vmem:[%s459 + $0x18] sm:$0xff]
        %v543 = vld [vmem:[%s459 + $0x20] sm:$0xff]
        %v544 = vld [vmem:[%s459 + $0x28] sm:$0xff]
        %v545 = vld [vmem:[%s459 + $0x30] sm:$0xff]
        %v546 = vld [vmem:[%s459 + $0x38] sm:$0xff]
        %v547 = vpack.c.bf16 %v540, %v539
        %v548 = vpack.c.bf16 %v542, %v541
        %v549 = vpack.c.bf16 %v544, %v543
        %v550 = vpack.c.bf16 %v546, %v545
        %v551 = vld [vmem:[%s3] sm:$0xff]
        %v552 = vld [vmem:[%s3 + $0x8] sm:$0xff]
        %v553 = vld [vmem:[%s3 + $0x10] sm:$0xff]
        %v554 = vld [vmem:[%s3 + $0x18] sm:$0xff]
        %v555 = vpack.c.bf16 %v552, %v551
        %v556 = vpack.c.bf16 %v554, %v553
        %vm557 = vcmask 261120
        %v559 = vsel %vm557, %v547, 0
        %v562 = vsel %vm557, %v548, 0
        %v565 = vsel %vm557, %v549, 0
        %v568 = vsel %vm557, %v550, 0
        %570 = vmatprep.subr.bf16.mxu0 0
        %571 = vmatpush1.bf16.msra.mxu0 0
        %572 = vmatprep.subr.bf16.mxu0 0
        %573 = vmatpush1.bf16.msra.mxu0 0
        %574 = vmatprep.subr.bf16.mxu0 0
        %575 = vmatpush1.bf16.msra.mxu0 0
        %576 = vmatprep.subr.bf16.mxu0 0
        %577 = vmatpush1.bf16.msra.mxu0 0
        %578 = vmatprep.subr.bf16.mxu0 0
        %579 = vmatpush1.bf16.msra.mxu0 0
        %580 = vmatprep.subr.bf16.mxu0 0
        %581 = vmatpush1.bf16.msra.mxu0 0
        %582 = vmatprep.subr.bf16.mxu0 0
        %583 = vmatpush1.bf16.msra.mxu0 %v556
        %584 = vmatprep.subr.bf16.mxu0 0
        %585 = vmatpush1.bf16.msra.mxu0 %v555
        %586 = vmatprep.subr.bf16.mxu0 0
        %587 = vmatpush2.bf16.msra.mxu0 0
        %588 = vmatprep.subr.bf16.mxu0 0
        %589 = vmatpush2.bf16.msra.mxu0 0
        %590 = vmatprep.subr.bf16.mxu0 0
        %591 = vmatpush2.bf16.msra.mxu0 0
        %592 = vmatprep.subr.bf16.mxu0 0
        %593 = vmatpush2.bf16.msra.mxu0 0
        %594 = vmatprep.subr.bf16.mxu0 0
        %595 = vmatpush2.bf16.msra.mxu0 0
        %596 = vmatprep.subr.bf16.mxu0 0
        %597 = vmatpush2.bf16.msra.mxu0 0
        %598 = vmatprep.subr.bf16.mxu0 0
        %599 = vmatpush2.bf16.msra.mxu0 0
        %600 = vmatprep.subr.bf16.mxu0 0
        %601 = vmatpush2.bf16.msra.mxu0 0
        %602 = vmatprep.mubr.bf16.mxu0 0
        %603 = vmatmul.mubr.bf16.gmra.mxu0 %v559
        %v604 = vpop.f32.mrf.mxu0
        %v605 = vadd.f32 0.0, %v604
        %v606 = vpop.f32.mrf.mxu0
        %v607 = vpop.f32.mrf.mxu0
        %v608 = vadd.f32 0.0, %v607
        %v609 = vpop.f32.mrf.mxu0
        %610 = vmatprep.mubr.bf16.mxu0 0
        %611 = vmatmul.mubr.bf16.gmra.mxu0 %v562
        %v612 = vpop.f32.mrf.mxu0
        %v613 = vadd.f32 0.0, %v612
        %v614 = vpop.f32.mrf.mxu0
        %v615 = vpop.f32.mrf.mxu0
        %v616 = vadd.f32 0.0, %v615
        %v617 = vpop.f32.mrf.mxu0
        %618 = vmatprep.mubr.bf16.mxu0 0
        %619 = vmatmul.mubr.bf16.gmra.mxu0 %v565
        %v620 = vpop.f32.mrf.mxu0
        %v621 = vadd.f32 0.0, %v620
        %v622 = vpop.f32.mrf.mxu0
        %v623 = vpop.f32.mrf.mxu0
        %v624 = vadd.f32 0.0, %v623
        %v625 = vpop.f32.mrf.mxu0
        %626 = vmatprep.mubr.bf16.mxu0 0
        %627 = vmatmul.mubr.bf16.gmra.mxu0 %v568
        %v628 = vpop.f32.mrf.mxu0
        %v629 = vadd.f32 0.0, %v628
        %v630 = vpop.f32.mrf.mxu0
        %v631 = vpop.f32.mrf.mxu0
        %v632 = vadd.f32 0.0, %v631
        %v633 = vpop.f32.mrf.mxu0
        %634 = vdwg.mxu0
        %v635 = vld [vmem:[%s466] sm:$0xff]
        %v636 = vld [vmem:[%s466 + $0x8] sm:$0xff]
        %v637 = vld [vmem:[%s466 + $0x10] sm:$0xff]
        %v638 = vld [vmem:[%s466 + $0x18] sm:$0xff]
        %v639 = vld [vmem:[%s466 + $0x20] sm:$0xff]
        %v640 = vld [vmem:[%s466 + $0x28] sm:$0xff]
        %v641 = vld [vmem:[%s466 + $0x30] sm:$0xff]
        %v642 = vld [vmem:[%s466 + $0x38] sm:$0xff]
        %v643 = vld [vmem:[%s473] sm:$0xff]
        %v644 = vld [vmem:[%s473 + $0x8] sm:$0xff]
        %v645 = vld [vmem:[%s473 + $0x10] sm:$0xff]
        %v646 = vld [vmem:[%s473 + $0x18] sm:$0xff]
        %v647 = vld [vmem:[%s473 + $0x20] sm:$0xff]
        %v648 = vld [vmem:[%s473 + $0x28] sm:$0xff]
        %v649 = vld [vmem:[%s473 + $0x30] sm:$0xff]
        %v650 = vld [vmem:[%s473 + $0x38] sm:$0xff]
        %651 = vmax.xlane.f32.xlu0 %v605
        %v652 = vpop.xlane.xlu0 %651
        %653 = vmax.xlane.f32.xlu0 %v608
        %v654 = vpop.xlane.xlu0 %653
        %655 = vmax.xlane.f32.xlu0 %v613
        %v656 = vpop.xlane.xlu0 %655
        %657 = vmax.xlane.f32.xlu0 %v616
        %v658 = vpop.xlane.xlu0 %657
        %659 = vmax.xlane.f32.xlu0 %v621
        %v660 = vpop.xlane.xlu0 %659
        %661 = vmax.xlane.f32.xlu0 %v624
        %v662 = vpop.xlane.xlu0 %661
        %663 = vmax.xlane.f32.xlu0 %v629
        %v664 = vpop.xlane.xlu0 %663
        %665 = vmax.xlane.f32.xlu0 %v632
        %v666 = vpop.xlane.xlu0 %665
        %v667 = vsub.f32 %v605, %v652
        %v668 = vsub.f32 %v608, %v654
        %v669 = vsub.f32 %v613, %v656
        %v670 = vsub.f32 %v616, %v658
        %v671 = vsub.f32 %v621, %v660
        %v672 = vsub.f32 %v624, %v662
        %v673 = vsub.f32 %v629, %v664
        %v674 = vsub.f32 %v632, %v666
        %v675 = vmul.f32 %v667, 1.442695
        %v676 = vpow.pop %v675
        %v677 = vmul.f32 %v668, 1.442695
        %v678 = vpow.pop %v677
        %v679 = vmul.f32 %v669, 1.442695
        %v680 = vpow.pop %v679
        %v681 = vmul.f32 %v670, 1.442695
        %v682 = vpow.pop %v681
        %v683 = vmul.f32 %v671, 1.442695
        %v684 = vpow.pop %v683
        %v685 = vmul.f32 %v672, 1.442695
        %v686 = vpow.pop %v685
        %v687 = vmul.f32 %v673, 1.442695
        %v688 = vpow.pop %v687
        %v689 = vmul.f32 %v674, 1.442695
        %v690 = vpow.pop %v689
        %691 = vadd.xlane.f32.xlu0 %v676
        %v692 = vpop.xlane.xlu0 %691
        %693 = vadd.xlane.f32.xlu0 %v678
        %v694 = vpop.xlane.xlu0 %693
        %695 = vadd.xlane.f32.xlu0 %v680
        %v696 = vpop.xlane.xlu0 %695
        %697 = vadd.xlane.f32.xlu0 %v682
        %v698 = vpop.xlane.xlu0 %697
        %699 = vadd.xlane.f32.xlu0 %v684
        %v700 = vpop.xlane.xlu0 %699
        %701 = vadd.xlane.f32.xlu0 %v686
        %v702 = vpop.xlane.xlu0 %701
        %703 = vadd.xlane.f32.xlu0 %v688
        %v704 = vpop.xlane.xlu0 %703
        %705 = vadd.xlane.f32.xlu0 %v690
        %v706 = vpop.xlane.xlu0 %705
        %v707 = vlog2.pop %v692
        %v708 = vmul.f32 %v707, 0.6931472
        %v709 = vlog2.pop %v694
        %v710 = vmul.f32 %v709, 0.6931472
        %v711 = vlog2.pop %v696
        %v712 = vmul.f32 %v711, 0.6931472
        %v713 = vlog2.pop %v698
        %v714 = vmul.f32 %v713, 0.6931472
        %v715 = vlog2.pop %v700
        %v716 = vmul.f32 %v715, 0.6931472
        %v717 = vlog2.pop %v702
        %v718 = vmul.f32 %v717, 0.6931472
        %v719 = vlog2.pop %v704
        %v720 = vmul.f32 %v719, 0.6931472
        %v721 = vlog2.pop %v706
        %v722 = vmul.f32 %v721, 0.6931472
        %v723 = vadd.f32 %v652, %v708
        %v724 = vadd.f32 %v654, %v710
        %v725 = vadd.f32 %v656, %v712
        %v726 = vadd.f32 %v658, %v714
        %v727 = vadd.f32 %v660, %v716
        %v728 = vadd.f32 %v662, %v718
        %v729 = vadd.f32 %v664, %v720
        %v730 = vadd.f32 %v666, %v722
        %v731 = vlaneseq
        %v732 = vand.u32 %v731, 127
        %733 = vset.pattern.permute.xlu0 0
        %734 = vperm.xlu0 %733, %v635
        %v735 = vpop.permute.xlu0 %734
        %736 = vset.pattern.permute.xlu0 0
        %737 = vperm.xlu0 %736, %v636
        %v738 = vpop.permute.xlu0 %737
        %739 = vset.pattern.permute.xlu0 0
        %740 = vperm.xlu0 %739, %v637
        %v741 = vpop.permute.xlu0 %740
        %742 = vset.pattern.permute.xlu0 0
        %743 = vperm.xlu0 %742, %v638
        %v744 = vpop.permute.xlu0 %743
        %745 = vset.pattern.permute.xlu0 0
        %746 = vperm.xlu0 %745, %v639
        %v747 = vpop.permute.xlu0 %746
        %748 = vset.pattern.permute.xlu0 0
        %749 = vperm.xlu0 %748, %v640
        %v750 = vpop.permute.xlu0 %749
        %751 = vset.pattern.permute.xlu0 0
        %752 = vperm.xlu0 %751, %v641
        %v753 = vpop.permute.xlu0 %752
        %754 = vset.pattern.permute.xlu0 0
        %755 = vperm.xlu0 %754, %v642
        %v756 = vpop.permute.xlu0 %755
        %vm757 = vcmp.eq.s32.totalorder %v732, %v735
        %vm758 = vcmp.eq.s32.totalorder %v732, %v738
        %vm759 = vcmp.eq.s32.totalorder %v732, %v741
        %vm760 = vcmp.eq.s32.totalorder %v732, %v744
        %vm761 = vcmp.eq.s32.totalorder %v732, %v747
        %vm762 = vcmp.eq.s32.totalorder %v732, %v750
        %vm763 = vcmp.eq.s32.totalorder %v732, %v753
        %vm764 = vcmp.eq.s32.totalorder %v732, %v756
        %v765 = vsel %vm757, %v605, 0.0
        %v766 = vsel %vm758, %v608, 0.0
        %v767 = vsel %vm759, %v613, 0.0
        %v768 = vsel %vm760, %v616, 0.0
        %v769 = vsel %vm761, %v621, 0.0
        %v770 = vsel %vm762, %v624, 0.0
        %v771 = vsel %vm763, %v629, 0.0
        %v772 = vsel %vm764, %v632, 0.0
        %773 = vadd.xlane.f32.xlu0 %v765
        %v774 = vpop.xlane.xlu0 %773
        %775 = vadd.xlane.f32.xlu0 %v766
        %v776 = vpop.xlane.xlu0 %775
        %777 = vadd.xlane.f32.xlu0 %v767
        %v778 = vpop.xlane.xlu0 %777
        %779 = vadd.xlane.f32.xlu0 %v768
        %v780 = vpop.xlane.xlu0 %779
        %781 = vadd.xlane.f32.xlu0 %v769
        %v782 = vpop.xlane.xlu0 %781
        %783 = vadd.xlane.f32.xlu0 %v770
        %v784 = vpop.xlane.xlu0 %783
        %785 = vadd.xlane.f32.xlu0 %v771
        %v786 = vpop.xlane.xlu0 %785
        %787 = vadd.xlane.f32.xlu0 %v772
        %v788 = vpop.xlane.xlu0 %787
        %vm789 = vcmp.ne.s32.totalorder %v635, 0
        %vm790 = vcmp.ne.s32.totalorder %v636, 0
        %vm791 = vcmp.ne.s32.totalorder %v637, 0
        %vm792 = vcmp.ne.s32.totalorder %v638, 0
        %vm793 = vcmp.ne.s32.totalorder %v639, 0
        %vm794 = vcmp.ne.s32.totalorder %v640, 0
        %vm795 = vcmp.ne.s32.totalorder %v641, 0
        %vm796 = vcmp.ne.s32.totalorder %v642, 0
        %v797 = vsel %vm789, 1, 0
        %v798 = vsel %vm790, 1, 0
        %v799 = vsel %vm791, 1, 0
        %v800 = vsel %vm792, 1, 0
        %v801 = vsel %vm793, 1, 0
        %v802 = vsel %vm794, 1, 0
        %v803 = vsel %vm795, 1, 0
        %v804 = vsel %vm796, 1, 0
        %v805 = vcvt.s32.f32 %v797
        %v806 = vcvt.s32.f32 %v798
        %v807 = vcvt.s32.f32 %v799
        %v808 = vcvt.s32.f32 %v800
        %v809 = vcvt.s32.f32 %v801
        %v810 = vcvt.s32.f32 %v802
        %v811 = vcvt.s32.f32 %v803
        %v812 = vcvt.s32.f32 %v804
        %v813 = vsub.f32 %v723, %v774
        %v814 = vsub.f32 %v724, %v776
        %v815 = vsub.f32 %v725, %v778
        %v816 = vsub.f32 %v726, %v780
        %v817 = vsub.f32 %v727, %v782
        %v818 = vsub.f32 %v728, %v784
        %v819 = vsub.f32 %v729, %v786
        %v820 = vsub.f32 %v730, %v788
        %v821 = vmul.f32 %v813, %v805
        %v822 = vmul.f32 %v814, %v806
        %v823 = vmul.f32 %v815, %v807
        %v824 = vmul.f32 %v816, %v808
        %v825 = vmul.f32 %v817, %v809
        %v826 = vmul.f32 %v818, %v810
        %v827 = vmul.f32 %v819, %v811
        %v828 = vmul.f32 %v820, %v812
        %vm829 = vcmp.ge.f32.partialorder %v774, %v652
        %vm830 = vcmp.ge.f32.partialorder %v776, %v654
        %vm831 = vcmp.ge.f32.partialorder %v778, %v656
        %vm832 = vcmp.ge.f32.partialorder %v780, %v658
        %vm833 = vcmp.ge.f32.partialorder %v782, %v660
        %vm834 = vcmp.ge.f32.partialorder %v784, %v662
        %vm835 = vcmp.ge.f32.partialorder %v786, %v664
        %vm836 = vcmp.ge.f32.partialorder %v788, %v666
        %v837 = vsel %vm829, 1, 0
        %v838 = vsel %vm830, 1, 0
        %v839 = vsel %vm831, 1, 0
        %v840 = vsel %vm832, 1, 0
        %v841 = vsel %vm833, 1, 0
        %v842 = vsel %vm834, 1, 0
        %v843 = vsel %vm835, 1, 0
        %v844 = vsel %vm836, 1, 0
        %v845 = vcvt.s32.f32 %v837
        %v846 = vcvt.s32.f32 %v838
        %v847 = vcvt.s32.f32 %v839
        %v848 = vcvt.s32.f32 %v840
        %v849 = vcvt.s32.f32 %v841
        %v850 = vcvt.s32.f32 %v842
        %v851 = vcvt.s32.f32 %v843
        %v852 = vcvt.s32.f32 %v844
        %v853 = vld [vmem:[%s521] sm:$0xff]
        %v854 = vmul.f32 %v821, %v643
        %v855 = vmul.f32 %v822, %v644
        %v856 = vmul.f32 %v823, %v645
        %v857 = vmul.f32 %v824, %v646
        %v858 = vmul.f32 %v825, %v647
        %v859 = vmul.f32 %v826, %v648
        %v860 = vmul.f32 %v827, %v649
        %v861 = vmul.f32 %v828, %v650
        %vm862 = vcmask 7168
        %v863 = vsel %vm862, %v854, 0.0
        %v864 = vsel %vm862, %v855, 0.0
        %v865 = vadd.f32 %v863, %v864
        %v866 = vsel %vm862, %v856, 0.0
        %v867 = vadd.f32 %v865, %v866
        %v868 = vsel %vm862, %v857, 0.0
        %v869 = vadd.f32 %v867, %v868
        %v870 = vsel %vm862, %v858, 0.0
        %v871 = vadd.f32 %v869, %v870
        %v872 = vsel %vm862, %v859, 0.0
        %v873 = vadd.f32 %v871, %v872
        %v874 = vsel %vm862, %v860, 0.0
        %v875 = vadd.f32 %v873, %v874
        %v876 = vsel %vm862, %v861, 0.0
        %v877 = vadd.f32 %v875, %v876
        %v878 = vadd.f32 %v853, %v877
        %879 = vst.msk [vmem:[%s521] sm:$0xff] %vm862, %v878
        %v880 = vld [vmem:[%s525] sm:$0xff]
        %v881 = vadd.f32 %v845, %v846
        %v882 = vadd.f32 %v881, %v847
        %v883 = vadd.f32 %v882, %v848
        %v884 = vadd.f32 %v883, %v849
        %v885 = vadd.f32 %v884, %v850
        %v886 = vadd.f32 %v885, %v851
        %v887 = vadd.f32 %v886, %v852
        %v888 = vadd.f32 %v880, %v887
        %889 = vst.msk [vmem:[%s525] sm:$0xff] %vm862, %v888
        %vm890 = vcmp.gt.f32.partialorder %v845, 0.0
        %vm891 = vcmp.gt.f32.partialorder %v846, 0.0
        %vm892 = vcmp.gt.f32.partialorder %v847, 0.0
        %vm893 = vcmp.gt.f32.partialorder %v848, 0.0
        %vm894 = vcmp.gt.f32.partialorder %v849, 0.0
        %vm895 = vcmp.gt.f32.partialorder %v850, 0.0
        %vm896 = vcmp.gt.f32.partialorder %v851, 0.0
        %vm897 = vcmp.gt.f32.partialorder %v852, 0.0
        %vm898 = vcmp.le.f32.partialorder %v643, 0.0
        %vm899 = vcmp.le.f32.partialorder %v644, 0.0
        %vm900 = vcmp.le.f32.partialorder %v645, 0.0
        %vm901 = vcmp.le.f32.partialorder %v646, 0.0
        %vm902 = vcmp.le.f32.partialorder %v647, 0.0
        %vm903 = vcmp.le.f32.partialorder %v648, 0.0
        %vm904 = vcmp.le.f32.partialorder %v649, 0.0
        %vm905 = vcmp.le.f32.partialorder %v650, 0.0
        %vm906 = vmor %vm890, %vm898
        %vm907 = vmor %vm891, %vm899
        %vm908 = vmor %vm892, %vm900
        %vm909 = vmor %vm893, %vm901
        %vm910 = vmor %vm894, %vm902
        %vm911 = vmor %vm895, %vm903
        %vm912 = vmor %vm896, %vm904
        %vm913 = vmor %vm897, %vm905
        %v914 = vsel %vm906, 1.0, 0.0
        %v915 = vsel %vm907, 1.0, 0.0
        %v916 = vsel %vm908, 1.0, 0.0
        %v917 = vsel %vm909, 1.0, 0.0
        %v918 = vsel %vm910, 1.0, 0.0
        %v919 = vsel %vm911, 1.0, 0.0
        %v920 = vsel %vm912, 1.0, 0.0
        %v921 = vsel %vm913, 1.0, 0.0
        %v922 = vld [vmem:[%s529] sm:$0xff]
        %v923 = vsel %vm862, %v914, inf
        %v924 = vsel %vm862, %v915, inf
        %v925 = vsel %vm862, %v916, inf
        %v926 = vsel %vm862, %v917, inf
        %v927 = vsel %vm862, %v918, inf
        %v928 = vmin.f32 %v923, %v927
        %v929 = vsel %vm862, %v919, inf
        %v930 = vmin.f32 %v924, %v929
        %v931 = vsel %vm862, %v920, inf
        %v932 = vmin.f32 %v925, %v931
        %v933 = vsel %vm862, %v921, inf
        %v934 = vmin.f32 %v926, %v933
        %v935 = vmin.f32 %v928, %v930
        %v936 = vmin.f32 %v932, %v934
        %v937 = vmin.f32 %v935, %v936
        %v938 = vmin.f32 %v922, %v937
        %939 = vst.msk [vmem:[%s529] sm:$0xff] %vm862, %v938
        %p940 = scmp.lt.s32.totalorder %s22, 1
        %s941 = scalar_select %p940, %s22, 1
        %s942 = smul.addr %s941, 8
        %s943 = scalar_lea.vmem %s4, %s942
        %p944 = scmp.lt.s32.totalorder %s22, 1
        %s945 = scalar_select %p944, %s22, 1
        %s946 = smul.addr %s945, 8
        %s947 = scalar_lea.vmem %s5, %s946
        %p948 = scmp.lt.s32.totalorder %s22, 1
        %s949 = scalar_select %p948, %s22, 1
        %s950 = smul.addr %s949, 8
        %s951 = scalar_lea.vmem %s6, %s950
        // Predicated region
        $region155: #{tpu_custom_call.1} parent=137 // pred_check
          %p952 = pneg %p153
        $region156: #{tpu_custom_call.1} parent=137 // pred_check_branch
          %954 = sbr.rel (%p952) target = $region158
        $region157: #{tpu_custom_call.1} parent=137 // pred_region
          _
        $region158: #{tpu_custom_call.1} parent=137 // pred_fallthru
          _
        // Predicated region
        $region159: #{tpu_custom_call.1} parent=137 // pred_check
          %p955 = pneg %p179
        $region160: #{tpu_custom_call.1} parent=137 // pred_check_branch
          %957 = sbr.rel (%p955) target = $region162
        $region161: #{tpu_custom_call.1} parent=137 // pred_region
          _
        $region162: #{tpu_custom_call.1} parent=137 // pred_fallthru
          _
        // Predicated region
        $region163: #{tpu_custom_call.1} parent=137 // pred_check
          %p958 = pneg %p205
        $region164: #{tpu_custom_call.1} parent=137 // pred_check_branch
          %960 = sbr.rel (%p958) target = $region166
        $region165: #{tpu_custom_call.1} parent=137 // pred_region
          _
        $region166: #{tpu_custom_call.1} parent=137 // pred_fallthru
          _
      $region138: #{tpu_custom_call.1} parent=5 // pred_fallthru
        _
      %p961 = scmp.le.s32.totalorder 2, %s13
      // Predicated region
      $region167: #{tpu_custom_call.1} parent=5 // pred_check
        %p962 = pneg %p961
      $region168: #{tpu_custom_call.1} parent=5 // pred_check_branch
        %964 = sbr.rel (%p962) target = $region170
      $region169: #{tpu_custom_call.1} parent=5 // pred_region
        %s965 = ssub.s32 %s13, 2
        // Predicated region
        $region171: #{tpu_custom_call.1} parent=169 // pred_check
          %p966 = pneg %p159
        $region172: #{tpu_custom_call.1} parent=169 // pred_check_branch
          %968 = sbr.rel (%p966) target = $region174
        $region173: #{tpu_custom_call.1} parent=169 // pred_region
          %p969 = scmp.lt.s32.totalorder %s24, 1
          %s970 = scalar_select %p969, %s24, 1
          %s971 = smul.addr %s970, 8
          %s972 = scalar_lea.vmem %s4, %s971
        $region174: #{tpu_custom_call.1} parent=169 // pred_fallthru
          _
        // Predicated region
        $region175: #{tpu_custom_call.1} parent=169 // pred_check
          %p973 = pneg %p185
        $region176: #{tpu_custom_call.1} parent=169 // pred_check_branch
          %975 = sbr.rel (%p973) target = $region178
        $region177: #{tpu_custom_call.1} parent=169 // pred_region
          %p976 = scmp.lt.s32.totalorder %s24, 1
          %s977 = scalar_select %p976, %s24, 1
          %s978 = smul.addr %s977, 8
          %s979 = scalar_lea.vmem %s5, %s978
        $region178: #{tpu_custom_call.1} parent=169 // pred_fallthru
          _
        // Predicated region
        $region179: #{tpu_custom_call.1} parent=169 // pred_check
          %p980 = pneg %p211
        $region180: #{tpu_custom_call.1} parent=169 // pred_check_branch
          %982 = sbr.rel (%p980) target = $region182
        $region181: #{tpu_custom_call.1} parent=169 // pred_region
          %p983 = scmp.lt.s32.totalorder %s24, 1
          %s984 = scalar_select %p983, %s24, 1
          %s985 = smul.addr %s984, 8
          %s986 = scalar_lea.vmem %s6, %s985
        $region182: #{tpu_custom_call.1} parent=169 // pred_fallthru
          _
      $region170: #{tpu_custom_call.1} parent=5 // pred_fallthru
        _
    $region6: #{tpu_custom_call.1} parent=1 // loop_footer
      %s17 = sadd.s32 1, %s13
    $region7: #{tpu_custom_call.1} parent=1 // loop_footer_branch
      %12 = sbr.rel target = $region3
    $region8: #{tpu_custom_call.1} parent=1 // loop_exit
      _

</llo_original>
